<compile_context>
chip_gen: v7x
topology: tpu7x:2x2x1
jax: 0.10.0
libtpu: 0.0.40
codegen_flags: <defaults>
</compile_context>

<pallas_src>
import jax
import jax.numpy as jnp
from jax.experimental import pallas as pl
from jax.experimental.pallas import tpu as pltpu


# ------------------------- model dimensions -------------------------
IMAGE_SIZE = 784
H_DIM = 500
Z_DIM = 20
N_CLASSES = 10
H5_DIM = H_DIM // 10          # 50

# lane-padded sizes
IMG_PAD = 896                 # 7 * 128  (lane-dense reconstruction output)
H_PAD = 512                   # 4 * 128
H5_PAD = 64
HEAD_PAD = 128                # [mu(20) | log_var(20) | logits(10) | pad(78)]
NOISE_PAD = 128               # [eps(20) | gumbel(10) | pad(98)]


def _round_up(x, m):
    return ((x + m - 1) // m) * m


def _choose_tiling(batch, max_tile=512):
    """Pick (tile_b, b_pad): tile multiple of 8, <= max_tile, grid >= 2 when
    possible (v7x dual TensorCore), minimal batch padding."""
    b8 = _round_up(max(batch, 1), 8)
    n_tiles = max(2 if b8 >= 16 else 1, -(-b8 // max_tile))
    tile = _round_up(-(-b8 // n_tiles), 8)
    b_pad = _round_up(b8, tile)
    return tile, b_pad


# ------------------------------ kernel ------------------------------
def vae_gumbel_kernel(
    # inputs
    x_ref, noise_ref,
    w1_ref, b1_ref, wh_ref, bh_ref,
    w5z_ref, w5y_ref, b5_ref, w6_ref, b6_ref,
    # outputs
    xrec_ref, slab_ref,
):
    f32 = jnp.float32
    bf16 = jnp.bfloat16

    # cast under the DMA shadow (VPU filler)
    x = x_ref[...].astype(bf16)                                        # (TB, 784)

    # ---------------- encode: fc1 + relu ----------------
    h = jnp.dot(x, w1_ref[...], preferred_element_type=f32) + b1_ref[...]
    h = jnp.maximum(h, 0.0).astype(bf16)                               # (TB, 512)

    # ---------------- fused heads: one 128-lane MXU push ----------------
    # lanes: [mu 0:20 | log_var 20:40 | logits 40:50 | 0]
    slab = jnp.dot(h, wh_ref[...], preferred_element_type=f32) + bh_ref[...]
    slab_ref[...] = slab                                               # (TB, 128) f32

    mu = slab[:, 0:Z_DIM]                                              # (TB, 20)
    log_var = slab[:, Z_DIM:2 * Z_DIM]                                 # (TB, 20)
    logits = slab[:, 2 * Z_DIM:2 * Z_DIM + N_CLASSES]                  # (TB, 10)

    eps = noise_ref[:, 0:Z_DIM]                                        # (TB, 20)
    g = noise_ref[:, Z_DIM:Z_DIM + N_CLASSES]                          # (TB, 10)

    # ---------------- reparameterize ----------------
    z = mu + eps * jnp.exp(0.5 * log_var)                              # (TB, 20)

    # ---- gumbel softmax (tau=1, soft); softmax is shift-invariant so raw
    # logits replace log_softmax(logits) exactly ----
    gl = logits + g
    gm = jnp.max(gl, axis=-1, keepdims=True)
    ge = jnp.exp(gl - gm)
    y = ge * pl.reciprocal(jnp.sum(ge, axis=-1, keepdims=True), approx=True)

    # ---------------- decode: fc5 as two small matmuls (no concat) ----------------
    h5 = (jnp.dot(z.astype(bf16), w5z_ref[...], preferred_element_type=f32)
          + jnp.dot(y.astype(bf16), w5y_ref[...], preferred_element_type=f32)
          + b5_ref[...])
    h5 = jnp.maximum(h5, 0.0).astype(bf16)                             # (TB, 64)

    # ---------------- fc6 + sigmoid (exp + reciprocal on EUP slot) ----------------
    out = jnp.dot(h5, w6_ref[...], preferred_element_type=f32) + b6_ref[...]
    sig = pl.reciprocal(1.0 + jnp.exp(-out), approx=True)
    xrec_ref[...] = sig.astype(xrec_ref.dtype)                         # (TB, 896) bf16


# ---------------------------- parameters ----------------------------
def init_params(key):
    """PyTorch-style nn.Linear init, packed into lane-friendly kernel layouts.

    Weights are (in, out) bf16 (x @ W + b); padding rows/cols are zero so
    padded lanes stay exactly zero.  Biases are f32 (1, out_pad).
    """
    def linear(k, fan_in, fan_out):
        kw, kb = jax.random.split(k)
        bound = 1.0 / jnp.sqrt(float(fan_in))
        w = jax.random.uniform(kw, (fan_in, fan_out), jnp.float32, -bound, bound)
        b = jax.random.uniform(kb, (fan_out,), jnp.float32, -bound, bound)
        return w, b

    keys = jax.random.split(key, 6)
    w1, b1 = linear(keys[0], IMAGE_SIZE, H_DIM)
    w2, b2 = linear(keys[1], H_DIM, Z_DIM)
    w3, b3 = linear(keys[2], H_DIM, Z_DIM)
    w4, b4 = linear(keys[3], H_DIM, N_CLASSES)
    w5, b5 = linear(keys[4], Z_DIM + N_CLASSES, H5_DIM)   # rows 0:20 = z, 20:30 = y
    w6, b6 = linear(keys[5], H5_DIM, IMAGE_SIZE)

    # fc1: (784, 512)
    w1p = jnp.zeros((IMAGE_SIZE, H_PAD), jnp.float32).at[:, :H_DIM].set(w1)
    b1p = jnp.zeros((1, H_PAD), jnp.float32).at[0, :H_DIM].set(b1)

    # fused heads: (512, 128) = [mu | log_var | logits | 0]
    wh = jnp.zeros((H_PAD, HEAD_PAD), jnp.float32)
    wh = wh.at[:H_DIM, 0:Z_DIM].set(w2)
    wh = wh.at[:H_DIM, Z_DIM:2 * Z_DIM].set(w3)
    wh = wh.at[:H_DIM, 2 * Z_DIM:2 * Z_DIM + N_CLASSES].set(w4)
    bh = jnp.zeros((1, HEAD_PAD), jnp.float32)
    bh = bh.at[0, 0:Z_DIM].set(b2)
    bh = bh.at[0, Z_DIM:2 * Z_DIM].set(b3)
    bh = bh.at[0, 2 * Z_DIM:2 * Z_DIM + N_CLASSES].set(b4)

    # fc5 split into z-rows / y-rows, output lanes padded to 64
    w5z = jnp.zeros((Z_DIM, H5_PAD), jnp.float32).at[:, :H5_DIM].set(w5[:Z_DIM])
    w5y = jnp.zeros((N_CLASSES, H5_PAD), jnp.float32).at[:, :H5_DIM].set(w5[Z_DIM:])
    b5p = jnp.zeros((1, H5_PAD), jnp.float32).at[0, :H5_DIM].set(b5)

    # fc6: (64, 896)
    w6p = jnp.zeros((H5_PAD, IMG_PAD), jnp.float32).at[:H5_DIM, :IMAGE_SIZE].set(w6)
    b6p = jnp.zeros((1, IMG_PAD), jnp.float32).at[0, :IMAGE_SIZE].set(b6)

    return dict(
        w1=w1p.astype(jnp.bfloat16), b1=b1p,
        w_heads=wh.astype(jnp.bfloat16), b_heads=bh,
        w5z=w5z.astype(jnp.bfloat16), w5y=w5y.astype(jnp.bfloat16), b5=b5p,
        w6=w6p.astype(jnp.bfloat16), b6=b6p,
    )


# ------------------------------ wrapper ------------------------------
@jax.jit
def vae_gumbel_forward(x_img, eps, gnoise, params):
    """x_img: (B, 1, 28, 28).  Returns (x_reconst, mu, log_var, log_p)."""
    B = x_img.shape[0]
    x = x_img.reshape(B, IMAGE_SIZE).astype(jnp.float32)   # x.view(-1, image_size)

    tile_b, b_pad = _choose_tiling(B)
    grid = (b_pad // tile_b,)

    if b_pad != B:
        x = jnp.pad(x, ((0, b_pad - B), (0, 0)))

    # single lane-dense noise slab: [eps | gumbel | 0]
    noise = jnp.zeros((b_pad, NOISE_PAD), jnp.float32)
    noise = noise.at[:B, 0:Z_DIM].set(eps)
    noise = noise.at[:B, Z_DIM:Z_DIM + N_CLASSES].set(gnoise)

    row = lambda i: (i, 0)          # blocked over batch
    rep = lambda i: (0, 0)          # weights: constant block -> resident in VMEM

    in_specs = [
        pl.BlockSpec((tile_b, IMAGE_SIZE), row),                                    # x
        pl.BlockSpec((tile_b, NOISE_PAD), row),                                     # noise slab
        pl.BlockSpec((IMAGE_SIZE, H_PAD), rep), pl.BlockSpec((1, H_PAD), rep),      # w1, b1
        pl.BlockSpec((H_PAD, HEAD_PAD), rep), pl.BlockSpec((1, HEAD_PAD), rep),     # fused heads
        pl.BlockSpec((Z_DIM, H5_PAD), rep), pl.BlockSpec((N_CLASSES, H5_PAD), rep), # w5z, w5y
        pl.BlockSpec((1, H5_PAD), rep),                                             # b5
        pl.BlockSpec((H5_PAD, IMG_PAD), rep), pl.BlockSpec((1, IMG_PAD), rep),      # w6, b6
    ]
    out_specs = (
        pl.BlockSpec((tile_b, IMG_PAD), row),      # x_reconst (bf16, lane-padded)
        pl.BlockSpec((tile_b, HEAD_PAD), row),     # [mu | log_var | logits | 0]
    )
    out_shapes = (
        jax.ShapeDtypeStruct((b_pad, IMG_PAD), jnp.bfloat16),
        jax.ShapeDtypeStruct((b_pad, HEAD_PAD), jnp.float32),
    )

    fn = pl.pallas_call(
        vae_gumbel_kernel,
        out_shape=out_shapes,
        grid=grid,
        in_specs=in_specs,
        out_specs=out_specs,
        compiler_params=pltpu.CompilerParams(
            dimension_semantics=("parallel",),
            vmem_limit_bytes=32 * 1024 * 1024,
        ),
    )

    xrec_p, slab = fn(
        x, noise,
        params["w1"], params["b1"],
        params["w_heads"], params["b_heads"],
        params["w5z"], params["w5y"], params["b5"],
        params["w6"], params["b6"],
    )

    x_reconst = xrec_p[:B, :IMAGE_SIZE].astype(jnp.float32)
    mu = slab[:B, 0:Z_DIM]
    log_var = slab[:B, Z_DIM:2 * Z_DIM]
    logits = slab[:B, 2 * Z_DIM:2 * Z_DIM + N_CLASSES]
    log_p = jax.nn.log_softmax(logits, axis=-1)     # trivial (B, 10) op in the wrapper
    return x_reconst, mu, log_var, log_p


# -------------------- pure-JAX reference (for checking) --------------------
def reference_forward(x_img, eps, gnoise, params):
    f32, bf16 = jnp.float32, jnp.bfloat16
    B = x_img.shape[0]
    x = x_img.reshape(B, IMAGE_SIZE).astype(bf16)
    h = jnp.maximum(jnp.dot(x, params["w1"], preferred_element_type=f32)
                    + params["b1"], 0.0).astype(bf16)
    slab = jnp.dot(h, params["w_heads"], preferred_element_type=f32) + params["b_heads"]
    mu = slab[:, 0:Z_DIM]
    log_var = slab[:, Z_DIM:2 * Z_DIM]
    logits = slab[:, 2 * Z_DIM:2 * Z_DIM + N_CLASSES]
    log_p = jax.nn.log_softmax(logits, axis=-1)
    z = mu + eps * jnp.exp(0.5 * log_var)
    y = jax.nn.softmax(log_p + gnoise, axis=-1)     # == softmax(logits + gnoise)
    h5 = jnp.maximum(
        jnp.dot(z.astype(bf16), params["w5z"], preferred_element_type=f32)
        + jnp.dot(y.astype(bf16), params["w5y"], preferred_element_type=f32)
        + params["b5"], 0.0).astype(bf16)
    out = jnp.dot(h5, params["w6"], preferred_element_type=f32) + params["b6"]
    x_reconst = jax.nn.sigmoid(out)[:, :IMAGE_SIZE]
    return x_reconst, mu, log_var, log_p


if __name__ == "__main__":
    key = jax.random.PRNGKey(0)
    k_param, k_x, k_eps, k_gum = jax.random.split(key, 4)

    B = 8
    params = init_params(k_param)
    x_img = jax.random.uniform(k_x, (B, 1, 28, 28), jnp.float32)     # NCHW input
    eps = jax.random.normal(k_eps, (B, Z_DIM), jnp.float32)          # randn_like(std)
    gnoise = jax.random.gumbel(k_gum, (B, N_CLASSES), jnp.float32)   # gumbel noise

    outs = vae_gumbel_forward(x_img, eps, gnoise, params)
    jax.block_until_ready(outs)
    x_reconst, mu, log_var, log_p = outs

    assert x_reconst.shape == (B, IMAGE_SIZE)
    assert mu.shape == (B, Z_DIM) and log_var.shape == (B, Z_DIM)
    assert log_p.shape == (B, N_CLASSES)
    # log_softmax rows sum to ~1 in prob space; sigmoid output in [0, 1]
    # (small slack for the approx-reciprocal sigmoid + bf16 store)
    assert jnp.allclose(jnp.sum(jnp.exp(log_p), axis=-1), 1.0, atol=1e-3)
    assert bool((x_reconst >= -1e-2).all()) and bool((x_reconst <= 1.0 + 1e-2).all())

    # compare against a pure-JAX reference using the same packed bf16 weights
    r_xrec, r_mu, r_lv, r_lp = reference_forward(x_img, eps, gnoise, params)
    assert jnp.allclose(x_reconst, r_xrec, rtol=2e-2, atol=2e-2)
    assert jnp.allclose(mu, r_mu, rtol=2e-2, atol=2e-2)
    assert jnp.allclose(log_var, r_lv, rtol=2e-2, atol=2e-2)
    assert jnp.allclose(log_p, r_lp, rtol=2e-2, atol=2e-2)

    print("KERNEL_OK")
</pallas_src>

<mosaic_0001>
module attributes {stable_mosaic.version = 11 : i64} {
  func.func @vae_gumbel_kernel(%arg0: i32, %arg1: memref<8x784xf32, #tpu.memory_space<vmem>>, %arg2: memref<8x128xf32, #tpu.memory_space<vmem>>, %arg3: memref<784x512xbf16, #tpu.memory_space<vmem>>, %arg4: memref<1x512xf32, #tpu.memory_space<vmem>>, %arg5: memref<512x128xbf16, #tpu.memory_space<vmem>>, %arg6: memref<1x128xf32, #tpu.memory_space<vmem>>, %arg7: memref<20x64xbf16, #tpu.memory_space<vmem>>, %arg8: memref<10x64xbf16, #tpu.memory_space<vmem>>, %arg9: memref<1x64xf32, #tpu.memory_space<vmem>>, %arg10: memref<64x896xbf16, #tpu.memory_space<vmem>>, %arg11: memref<1x896xf32, #tpu.memory_space<vmem>>, %arg12: memref<8x896xbf16, #tpu.memory_space<vmem>>, %arg13: memref<8x128xf32, #tpu.memory_space<vmem>>) attributes {dimension_semantics = [#tpu.dimension_semantics<parallel>], iteration_bounds = array<i64: 1>, scalar_prefetch = 0 : i64, scratch_operands = 0 : i64, tpu.core_type = #tpu.core_type<tc>, window_params = [{transform_indices = @transform_0, window_bounds = array<i64: 8, 784>}, {transform_indices = @transform_1, window_bounds = array<i64: 8, 128>}, {pipeline_mode = #tpu.pipeline_mode<synchronous>, transform_indices = @transform_2, window_bounds = array<i64: 784, 512>}, {pipeline_mode = #tpu.pipeline_mode<synchronous>, transform_indices = @transform_3, window_bounds = array<i64: 1, 512>}, {pipeline_mode = #tpu.pipeline_mode<synchronous>, transform_indices = @transform_4, window_bounds = array<i64: 512, 128>}, {pipeline_mode = #tpu.pipeline_mode<synchronous>, transform_indices = @transform_5, window_bounds = array<i64: 1, 128>}, {pipeline_mode = #tpu.pipeline_mode<synchronous>, transform_indices = @transform_6, window_bounds = array<i64: 20, 64>}, {pipeline_mode = #tpu.pipeline_mode<synchronous>, transform_indices = @transform_7, window_bounds = array<i64: 10, 64>}, {pipeline_mode = #tpu.pipeline_mode<synchronous>, transform_indices = @transform_8, window_bounds = array<i64: 1, 64>}, {pipeline_mode = #tpu.pipeline_mode<synchronous>, transform_indices = @transform_9, window_bounds = array<i64: 64, 896>}, {pipeline_mode = #tpu.pipeline_mode<synchronous>, transform_indices = @transform_10, window_bounds = array<i64: 1, 896>}, {transform_indices = @transform_11, window_bounds = array<i64: 8, 896>}, {transform_indices = @transform_12, window_bounds = array<i64: 8, 128>}]} {
    %c0 = arith.constant 0 : index
    %c0_0 = arith.constant 0 : index
    %0 = vector.load %arg1[%c0, %c0_0] : memref<8x784xf32, #tpu.memory_space<vmem>>, vector<8x784xf32>
    %1 = arith.truncf %0 : vector<8x784xf32> to vector<8x784xbf16>
    %c0_1 = arith.constant 0 : index
    %c0_2 = arith.constant 0 : index
    %2 = vector.load %arg3[%c0_1, %c0_2] : memref<784x512xbf16, #tpu.memory_space<vmem>>, vector<784x512xbf16>
    %cst = arith.constant dense<0.000000e+00> : vector<8x512xf32>
    %3 = tpu.matmul %1, %2, %cst {dimension_numbers = #tpu.dot_dimension_numbers<[1], [0], [0], [1], [0, 0, 1, 1], [], []>} : vector<8x784xbf16>, vector<784x512xbf16>, vector<8x512xf32> -> vector<8x512xf32>
    %c0_3 = arith.constant 0 : index
    %c0_4 = arith.constant 0 : index
    %4 = vector.load %arg4[%c0_3, %c0_4] : memref<1x512xf32, #tpu.memory_space<vmem>>, vector<1x512xf32>
    %5 = vector.broadcast %4 : vector<1x512xf32> to vector<8x512xf32>
    %6 = arith.addf %3, %5 : vector<8x512xf32>
    %cst_5 = arith.constant 0.000000e+00 : f32
    %7 = vector.broadcast %cst_5 : f32 to vector<8x512xf32>
    %8 = arith.maximumf %6, %7 : vector<8x512xf32>
    %9 = arith.truncf %8 : vector<8x512xf32> to vector<8x512xbf16>
    %c0_6 = arith.constant 0 : index
    %c0_7 = arith.constant 0 : index
    %10 = vector.load %arg5[%c0_6, %c0_7] : memref<512x128xbf16, #tpu.memory_space<vmem>>, vector<512x128xbf16>
    %cst_8 = arith.constant dense<0.000000e+00> : vector<8x128xf32>
    %11 = tpu.matmul %9, %10, %cst_8 {dimension_numbers = #tpu.dot_dimension_numbers<[1], [0], [0], [1], [0, 0, 1, 1], [], []>} : vector<8x512xbf16>, vector<512x128xbf16>, vector<8x128xf32> -> vector<8x128xf32>
    %c0_9 = arith.constant 0 : index
    %c0_10 = arith.constant 0 : index
    %12 = vector.load %arg6[%c0_9, %c0_10] : memref<1x128xf32, #tpu.memory_space<vmem>>, vector<1x128xf32>
    %13 = vector.broadcast %12 : vector<1x128xf32> to vector<8x128xf32>
    %14 = arith.addf %11, %13 : vector<8x128xf32>
    %c0_11 = arith.constant 0 : index
    %c0_12 = arith.constant 0 : index
    %15 = vector.load %arg13[%c0_11, %c0_12] : memref<8x128xf32, #tpu.memory_space<vmem>>, vector<8x128xf32>
    tpu.vector_store %arg13[%c0_11, %c0_12], %14 {strides = array<i32>} : memref<8x128xf32, #tpu.memory_space<vmem>>, vector<8x128xf32>,
    %16 = vector.extract_strided_slice %14 {offsets = [0, 0], sizes = [8, 20], strides = [1, 1]} : vector<8x128xf32> to vector<8x20xf32>
    %17 = vector.extract_strided_slice %14 {offsets = [0, 20], sizes = [8, 20], strides = [1, 1]} : vector<8x128xf32> to vector<8x20xf32>
    %18 = vector.extract_strided_slice %14 {offsets = [0, 40], sizes = [8, 10], strides = [1, 1]} : vector<8x128xf32> to vector<8x10xf32>
    %c0_13 = arith.constant 0 : index
    %c0_14 = arith.constant 0 : index
    %19 = vector.load %arg2[%c0_13, %c0_14] : memref<8x128xf32, #tpu.memory_space<vmem>>, vector<8x20xf32>
    %c0_15 = arith.constant 0 : index
    %c20 = arith.constant 20 : index
    %20 = vector.load %arg2[%c0_15, %c20] : memref<8x128xf32, #tpu.memory_space<vmem>>, vector<8x10xf32>
    %cst_16 = arith.constant 5.000000e-01 : f32
    %21 = vector.broadcast %cst_16 : f32 to vector<8x20xf32>
    %22 = arith.mulf %21, %17 : vector<8x20xf32>
    %23 = math.exp %22 : vector<8x20xf32>
    %24 = arith.mulf %19, %23 : vector<8x20xf32>
    %25 = arith.addf %16, %24 : vector<8x20xf32>
    %26 = arith.addf %18, %20 : vector<8x10xf32>
    %cst_17 = arith.constant dense<0xFF800000> : vector<8xf32>
    %27 = vector.multi_reduction <maximumf>, %26, %cst_17 [1] : vector<8x10xf32> to vector<8xf32>
    %28 = vector.shape_cast %27 : vector<8xf32> to vector<8x1xf32>
    %29 = vector.broadcast %28 : vector<8x1xf32> to vector<8x10xf32>
    %30 = arith.subf %26, %29 : vector<8x10xf32>
    %31 = math.exp %30 : vector<8x10xf32>
    %cst_18 = arith.constant dense<0.000000e+00> : vector<8xf32>
    %32 = vector.multi_reduction <add>, %31, %cst_18 [1] : vector<8x10xf32> to vector<8xf32>
    %33 = vector.shape_cast %32 : vector<8xf32> to vector<8x1xf32>
    %34 = tpu.reciprocal %33 {approx = true} : vector<8x1xf32> -> vector<8x1xf32>
    %35 = vector.broadcast %34 : vector<8x1xf32> to vector<8x10xf32>
    %36 = arith.mulf %31, %35 : vector<8x10xf32>
    %37 = arith.truncf %25 : vector<8x20xf32> to vector<8x20xbf16>
    %c0_19 = arith.constant 0 : index
    %c0_20 = arith.constant 0 : index
    %38 = vector.load %arg7[%c0_19, %c0_20] : memref<20x64xbf16, #tpu.memory_space<vmem>>, vector<20x64xbf16>
    %cst_21 = arith.constant dense<0.000000e+00> : vector<8x64xf32>
    %39 = tpu.matmul %37, %38, %cst_21 {dimension_numbers = #tpu.dot_dimension_numbers<[1], [0], [0], [1], [0, 0, 1, 1], [], []>} : vector<8x20xbf16>, vector<20x64xbf16>, vector<8x64xf32> -> vector<8x64xf32>
    %40 = arith.truncf %36 : vector<8x10xf32> to vector<8x10xbf16>
    %c0_22 = arith.constant 0 : index
    %c0_23 = arith.constant 0 : index
    %41 = vector.load %arg8[%c0_22, %c0_23] : memref<10x64xbf16, #tpu.memory_space<vmem>>, vector<10x64xbf16>
    %cst_24 = arith.constant dense<0.000000e+00> : vector<8x64xf32>
    %42 = tpu.matmul %40, %41, %cst_24 {dimension_numbers = #tpu.dot_dimension_numbers<[1], [0], [0], [1], [0, 0, 1, 1], [], []>} : vector<8x10xbf16>, vector<10x64xbf16>, vector<8x64xf32> -> vector<8x64xf32>
    %43 = arith.addf %39, %42 : vector<8x64xf32>
    %c0_25 = arith.constant 0 : index
    %c0_26 = arith.constant 0 : index
    %44 = vector.load %arg9[%c0_25, %c0_26] : memref<1x64xf32, #tpu.memory_space<vmem>>, vector<1x64xf32>
    %45 = vector.broadcast %44 : vector<1x64xf32> to vector<8x64xf32>
    %46 = arith.addf %43, %45 : vector<8x64xf32>
    %cst_27 = arith.constant 0.000000e+00 : f32
    %47 = vector.broadcast %cst_27 : f32 to vector<8x64xf32>
    %48 = arith.maximumf %46, %47 : vector<8x64xf32>
    %49 = arith.truncf %48 : vector<8x64xf32> to vector<8x64xbf16>
    %c0_28 = arith.constant 0 : index
    %c0_29 = arith.constant 0 : index
    %50 = vector.load %arg10[%c0_28, %c0_29] : memref<64x896xbf16, #tpu.memory_space<vmem>>, vector<64x896xbf16>
    %cst_30 = arith.constant dense<0.000000e+00> : vector<8x896xf32>
    %51 = tpu.matmul %49, %50, %cst_30 {dimension_numbers = #tpu.dot_dimension_numbers<[1], [0], [0], [1], [0, 0, 1, 1], [], []>} : vector<8x64xbf16>, vector<64x896xbf16>, vector<8x896xf32> -> vector<8x896xf32>
    %c0_31 = arith.constant 0 : index
    %c0_32 = arith.constant 0 : index
    %52 = vector.load %arg11[%c0_31, %c0_32] : memref<1x896xf32, #tpu.memory_space<vmem>>, vector<1x896xf32>
    %53 = vector.broadcast %52 : vector<1x896xf32> to vector<8x896xf32>
    %54 = arith.addf %51, %53 : vector<8x896xf32>
    %cst_33 = arith.constant 0.000000e+00 : f32
    %55 = vector.broadcast %cst_33 : f32 to vector<8x896xf32>
    %56 = arith.subf %55, %54 : vector<8x896xf32>
    %57 = math.exp %56 : vector<8x896xf32>
    %cst_34 = arith.constant 1.000000e+00 : f32
    %58 = vector.broadcast %cst_34 : f32 to vector<8x896xf32>
    %59 = arith.addf %58, %57 : vector<8x896xf32>
    %60 = tpu.reciprocal %59 {approx = true} : vector<8x896xf32> -> vector<8x896xf32>
    %61 = arith.truncf %60 : vector<8x896xf32> to vector<8x896xbf16>
    %c0_35 = arith.constant 0 : index
    %c0_36 = arith.constant 0 : index
    %62 = vector.load %arg12[%c0_35, %c0_36] : memref<8x896xbf16, #tpu.memory_space<vmem>>, vector<8x896xbf16>
    tpu.vector_store %arg12[%c0_35, %c0_36], %61 {strides = array<i32>} : memref<8x896xbf16, #tpu.memory_space<vmem>>, vector<8x896xbf16>,
    return
  }
  func.func @transform_0(%arg0: i32) -> (i32, i32) {
    %c0_i32 = arith.constant 0 : i32
    %c0_i32_0 = arith.constant 0 : i32
    return %arg0, %c0_i32 : i32, i32
  }
  func.func @transform_1(%arg0: i32) -> (i32, i32) {
    %c0_i32 = arith.constant 0 : i32
    %c0_i32_0 = arith.constant 0 : i32
    return %arg0, %c0_i32 : i32, i32
  }
  func.func @transform_2(%arg0: i32) -> (i32, i32) {
    %c0_i32 = arith.constant 0 : i32
    %c0_i32_0 = arith.constant 0 : i32
    %c0_i32_1 = arith.constant 0 : i32
    return %c0_i32, %c0_i32_0 : i32, i32
  }
  func.func @transform_3(%arg0: i32) -> (i32, i32) {
    %c0_i32 = arith.constant 0 : i32
    %c0_i32_0 = arith.constant 0 : i32
    %c0_i32_1 = arith.constant 0 : i32
    return %c0_i32, %c0_i32_0 : i32, i32
  }
  func.func @transform_4(%arg0: i32) -> (i32, i32) {
    %c0_i32 = arith.constant 0 : i32
    %c0_i32_0 = arith.constant 0 : i32
    %c0_i32_1 = arith.constant 0 : i32
    return %c0_i32, %c0_i32_0 : i32, i32
  }
  func.func @transform_5(%arg0: i32) -> (i32, i32) {
    %c0_i32 = arith.constant 0 : i32
    %c0_i32_0 = arith.constant 0 : i32
    %c0_i32_1 = arith.constant 0 : i32
    return %c0_i32, %c0_i32_0 : i32, i32
  }
  func.func @transform_6(%arg0: i32) -> (i32, i32) {
    %c0_i32 = arith.constant 0 : i32
    %c0_i32_0 = arith.constant 0 : i32
    %c0_i32_1 = arith.constant 0 : i32
    return %c0_i32, %c0_i32_0 : i32, i32
  }
  func.func @transform_7(%arg0: i32) -> (i32, i32) {
    %c0_i32 = arith.constant 0 : i32
    %c0_i32_0 = arith.constant 0 : i32
    %c0_i32_1 = arith.constant 0 : i32
    return %c0_i32, %c0_i32_0 : i32, i32
  }
  func.func @transform_8(%arg0: i32) -> (i32, i32) {
    %c0_i32 = arith.constant 0 : i32
    %c0_i32_0 = arith.constant 0 : i32
    %c0_i32_1 = arith.constant 0 : i32
    return %c0_i32, %c0_i32_0 : i32, i32
  }
  func.func @transform_9(%arg0: i32) -> (i32, i32) {
    %c0_i32 = arith.constant 0 : i32
    %c0_i32_0 = arith.constant 0 : i32
    %c0_i32_1 = arith.constant 0 : i32
    return %c0_i32, %c0_i32_0 : i32, i32
  }
  func.func @transform_10(%arg0: i32) -> (i32, i32) {
    %c0_i32 = arith.constant 0 : i32
    %c0_i32_0 = arith.constant 0 : i32
    %c0_i32_1 = arith.constant 0 : i32
    return %c0_i32, %c0_i32_0 : i32, i32
  }
  func.func @transform_11(%arg0: i32) -> (i32, i32) {
    %c0_i32 = arith.constant 0 : i32
    %c0_i32_0 = arith.constant 0 : i32
    return %arg0, %c0_i32 : i32, i32
  }
  func.func @transform_12(%arg0: i32) -> (i32, i32) {
    %c0_i32 = arith.constant 0 : i32
    %c0_i32_0 = arith.constant 0 : i32
    return %arg0, %c0_i32 : i32, i32
  }
}

</mosaic_0001>

<llo_original>
// kernel: vae_gumbel_forward.1
$region0: #{vae_gumbel_forward.1}
  #allocation0 [shape = 'u32[]', space=smem, size = 0x4, offset = 0x4, fixed_abs, tag = 'smem constant byte address 0x4 - core index']
  #allocation1 [shape = 'u32[144,128]{1,0:T(1,128)}', space=vmem, size = 0x12000, scoped, tag = 'internal scratch']
  %s0 = inlined_call_operand.vmem [shape: f32[8,784], index: 0, kind: input, shape index: {}]
  %s1 = inlined_call_operand.vmem [shape: f32[8,128], index: 1, kind: input, shape index: {}]
  %s2 = inlined_call_operand.hbm [shape: bf16[784,512], index: 2, kind: input, shape index: {}]
  %s3 = inlined_call_operand.vmem [shape: f32[1,512], index: 3, kind: input, shape index: {}]
  %s4 = inlined_call_operand.vmem [shape: bf16[512,128], index: 4, kind: input, shape index: {}]
  %s5 = inlined_call_operand.vmem [shape: f32[1,128], index: 5, kind: input, shape index: {}]
  %s6 = inlined_call_operand.vmem [shape: bf16[20,64], index: 6, kind: input, shape index: {}]
  %s7 = inlined_call_operand.vmem [shape: bf16[10,64], index: 7, kind: input, shape index: {}]
  %s8 = inlined_call_operand.vmem [shape: f32[1,64], index: 8, kind: input, shape index: {}]
  %s9 = inlined_call_operand.vmem [shape: bf16[64,896], index: 9, kind: input, shape index: {}]
  %s10 = inlined_call_operand.vmem [shape: f32[1,896], index: 10, kind: input, shape index: {}]
  %s11 = inlined_call_operand.vmem [shape: bf16[8,896], index: 11, kind: output, shape index: {0}]
  %s12 = inlined_call_operand.vmem [shape: f32[8,128], index: 12, kind: output, shape index: {1}]
  %13 = xla_tuple %s11, %s12
  %s14 = sld [smem:[#allocation0]]
  $region66: #{vae_gumbel_forward.1} parent=0
    _
  %s16 = ssub.s32 1, %s14
  %s17 = scalar_select 0, %s16, %s14
  $region1: #{vae_gumbel_forward.1} parent=0
    #allocation2 [shape = 'u8[802816]{0}', space=vmem, size = 0xc4000, scoped, tag = 'input window, operand 2, single buffered']
    #allocation3 [shape = 's32[1]{0}', space=sflag, size = 0x4, scoped, tag = 'scoped memory for vae_gumbel_forward.1']
    %18 = vsyncpa [#allocation3], 0
    // Predicated region
    $region2: #{vae_gumbel_forward.1} parent=1 // pred_check
      _
    $region3: #{vae_gumbel_forward.1} parent=1 // pred_check_branch
      %20 = sbr.rel (0) target = $region5
    $region4: #{vae_gumbel_forward.1} parent=1 // pred_region
      _
    $region5: #{vae_gumbel_forward.1} parent=1 // pred_fallthru
      _
    // Predicated region
    $region6: #{vae_gumbel_forward.1} parent=1 // pred_check
      _
    $region7: #{vae_gumbel_forward.1} parent=1 // pred_check_branch
      %22 = sbr.rel (0) target = $region9
    $region8: #{vae_gumbel_forward.1} parent=1 // pred_region
      _
    $region9: #{vae_gumbel_forward.1} parent=1 // pred_fallthru
      _
    // Predicated region
    $region10: #{vae_gumbel_forward.1} parent=1 // pred_check
      _
    $region11: #{vae_gumbel_forward.1} parent=1 // pred_check_branch
      %24 = sbr.rel (0) target = $region13
    $region12: #{vae_gumbel_forward.1} parent=1 // pred_region
      %s26 = ssub.s32 25088, 25088
      %27 = vsyncadd [#allocation3], %s26
      %s28 = sshll.u32 [#allocation2], 4
      %s29 = int_to_ptr.vmem [resolvable:$true] %s28
      %34 = dma.hbm_to_vmem [thread:$0]  %s2, 25088, %s29, [#allocation3], 256, 256, 16
    $region13: #{vae_gumbel_forward.1} parent=1 // pred_fallthru
      _
    // Predicated region
    $region14: #{vae_gumbel_forward.1} parent=1 // pred_check
      _
    $region15: #{vae_gumbel_forward.1} parent=1 // pred_check_branch
      %36 = sbr.rel (0) target = $region17
    $region16: #{vae_gumbel_forward.1} parent=1 // pred_region
      _
    $region17: #{vae_gumbel_forward.1} parent=1 // pred_fallthru
      _
    // Predicated region
    $region18: #{vae_gumbel_forward.1} parent=1 // pred_check
      _
    $region19: #{vae_gumbel_forward.1} parent=1 // pred_check_branch
      %38 = sbr.rel (0) target = $region21
    $region20: #{vae_gumbel_forward.1} parent=1 // pred_region
      _
    $region21: #{vae_gumbel_forward.1} parent=1 // pred_fallthru
      _
    // Predicated region
    $region22: #{vae_gumbel_forward.1} parent=1 // pred_check
      _
    $region23: #{vae_gumbel_forward.1} parent=1 // pred_check_branch
      %40 = sbr.rel (0) target = $region25
    $region24: #{vae_gumbel_forward.1} parent=1 // pred_region
      _
    $region25: #{vae_gumbel_forward.1} parent=1 // pred_fallthru
      _
    // Predicated region
    $region26: #{vae_gumbel_forward.1} parent=1 // pred_check
      _
    $region27: #{vae_gumbel_forward.1} parent=1 // pred_check_branch
      %42 = sbr.rel (0) target = $region29
    $region28: #{vae_gumbel_forward.1} parent=1 // pred_region
      _
    $region29: #{vae_gumbel_forward.1} parent=1 // pred_fallthru
      _
    // Predicated region
    $region30: #{vae_gumbel_forward.1} parent=1 // pred_check
      _
    $region31: #{vae_gumbel_forward.1} parent=1 // pred_check_branch
      %44 = sbr.rel (0) target = $region33
    $region32: #{vae_gumbel_forward.1} parent=1 // pred_region
      _
    $region33: #{vae_gumbel_forward.1} parent=1 // pred_fallthru
      _
    // Predicated region
    $region34: #{vae_gumbel_forward.1} parent=1 // pred_check
      _
    $region35: #{vae_gumbel_forward.1} parent=1 // pred_check_branch
      %46 = sbr.rel (0) target = $region37
    $region36: #{vae_gumbel_forward.1} parent=1 // pred_region
      _
    $region37: #{vae_gumbel_forward.1} parent=1 // pred_fallthru
      _
    // Predicated region
    $region38: #{vae_gumbel_forward.1} parent=1 // pred_check
      _
    $region39: #{vae_gumbel_forward.1} parent=1 // pred_check_branch
      %48 = sbr.rel (0) target = $region41
    $region40: #{vae_gumbel_forward.1} parent=1 // pred_region
      _
    $region41: #{vae_gumbel_forward.1} parent=1 // pred_fallthru
      _
    // Predicated region
    $region42: #{vae_gumbel_forward.1} parent=1 // pred_check
      _
    $region43: #{vae_gumbel_forward.1} parent=1 // pred_check_branch
      %50 = sbr.rel (0) target = $region45
    $region44: #{vae_gumbel_forward.1} parent=1 // pred_region
      _
    $region45: #{vae_gumbel_forward.1} parent=1 // pred_fallthru
      _
    // Predicated region
    $region46: #{vae_gumbel_forward.1} parent=1 // pred_check
      _
    $region47: #{vae_gumbel_forward.1} parent=1 // pred_check_branch
      %52 = sbr.rel (0) target = $region49
    $region48: #{vae_gumbel_forward.1} parent=1 // pred_region
      %53 = dma.done [#allocation3], 25088
    $region49: #{vae_gumbel_forward.1} parent=1 // pred_fallthru
      _
    %v55 = vld [vmem:[%s0] sm:$0xff]
    %v56 = vld [vmem:[%s0 + $0x8] sm:$0xff]
    %v57 = vld [vmem:[%s0 + $0x10] sm:$0xff]
    %v58 = vld [vmem:[%s0 + $0x18] sm:$0xff]
    %v59 = vld [vmem:[%s0 + $0x20] sm:$0xff]
    %v60 = vld [vmem:[%s0 + $0x28] sm:$0xff]
    %v61 = vld [vmem:[%s0 + $0x30] sm:$0xff]
    %v62 = vpack.c.bf16 %v55, %v55
    %v63 = vpack.c.bf16 %v56, %v56
    %v64 = vpack.c.bf16 %v57, %v57
    %v65 = vpack.c.bf16 %v58, %v58
    %v66 = vpack.c.bf16 %v59, %v59
    %v67 = vpack.c.bf16 %v60, %v60
    %v68 = vpack.c.bf16 %v61, %v61
    %v69 = vld [vmem:[#allocation2] sm:$0xff]
    %v70 = vld [vmem:[#allocation2 + $0x8] sm:$0xff]
    %v71 = vld [vmem:[#allocation2 + $0x10] sm:$0xff]
    %v72 = vld [vmem:[#allocation2 + $0x18] sm:$0xff]
    %v73 = vld [vmem:[#allocation2 + $0x20] sm:$0xff]
    %v74 = vld [vmem:[#allocation2 + $0x28] sm:$0xff]
    %v75 = vld [vmem:[#allocation2 + $0x30] sm:$0xff]
    %v76 = vld [vmem:[#allocation2 + $0x38] sm:$0xff]
    %v77 = vld [vmem:[#allocation2 + $0x40] sm:$0xff]
    %v78 = vld [vmem:[#allocation2 + $0x48] sm:$0xff]
    %v79 = vld [vmem:[#allocation2 + $0x50] sm:$0xff]
    %v80 = vld [vmem:[#allocation2 + $0x58] sm:$0xff]
    %v81 = vld [vmem:[#allocation2 + $0x60] sm:$0xff]
    %v82 = vld [vmem:[#allocation2 + $0x68] sm:$0xff]
    %v83 = vld [vmem:[#allocation2 + $0x70] sm:$0xff]
    %v84 = vld [vmem:[#allocation2 + $0x78] sm:$0xff]
    %v85 = vld [vmem:[#allocation2 + $0x80] sm:$0xff]
    %v86 = vld [vmem:[#allocation2 + $0x88] sm:$0xff]
    %v87 = vld [vmem:[#allocation2 + $0x90] sm:$0xff]
    %v88 = vld [vmem:[#allocation2 + $0x98] sm:$0xff]
    %v89 = vld [vmem:[#allocation2 + $0xa0] sm:$0xff]
    %v90 = vld [vmem:[#allocation2 + $0xa8] sm:$0xff]
    %v91 = vld [vmem:[#allocation2 + $0xb0] sm:$0xff]
    %v92 = vld [vmem:[#allocation2 + $0xb8] sm:$0xff]
    %v93 = vld [vmem:[#allocation2 + $0xc0] sm:$0xff]
    %v94 = vld [vmem:[#allocation2 + $0xc8] sm:$0xff]
    %v95 = vld [vmem:[#allocation2 + $0xd0] sm:$0xff]
    %v96 = vld [vmem:[#allocation2 + $0xd8] sm:$0xff]
    %v97 = vld [vmem:[#allocation2 + $0xe0] sm:$0xff]
    %v98 = vld [vmem:[#allocation2 + $0xe8] sm:$0xff]
    %v99 = vld [vmem:[#allocation2 + $0xf0] sm:$0xff]
    %v100 = vld [vmem:[#allocation2 + $0xf8] sm:$0xff]
    %v101 = vld [vmem:[#allocation2 + $0x100] sm:$0xff]
    %v102 = vld [vmem:[#allocation2 + $0x108] sm:$0xff]
    %v103 = vld [vmem:[#allocation2 + $0x110] sm:$0xff]
    %v104 = vld [vmem:[#allocation2 + $0x118] sm:$0xff]
    %v105 = vld [vmem:[#allocation2 + $0x120] sm:$0xff]
    %v106 = vld [vmem:[#allocation2 + $0x128] sm:$0xff]
    %v107 = vld [vmem:[#allocation2 + $0x130] sm:$0xff]
    %v108 = vld [vmem:[#allocation2 + $0x138] sm:$0xff]
    %v109 = vld [vmem:[#allocation2 + $0x140] sm:$0xff]
    %v110 = vld [vmem:[#allocation2 + $0x148] sm:$0xff]
    %v111 = vld [vmem:[#allocation2 + $0x150] sm:$0xff]
    %v112 = vld [vmem:[#allocation2 + $0x158] sm:$0xff]
    %v113 = vld [vmem:[#allocation2 + $0x160] sm:$0xff]
    %v114 = vld [vmem:[#allocation2 + $0x168] sm:$0xff]
    %v115 = vld [vmem:[#allocation2 + $0x170] sm:$0xff]
    %v116 = vld [vmem:[#allocation2 + $0x178] sm:$0xff]
    %v117 = vld [vmem:[#allocation2 + $0x180] sm:$0xff]
    %v118 = vld [vmem:[#allocation2 + $0x188] sm:$0xff]
    %v119 = vld [vmem:[#allocation2 + $0x190] sm:$0xff]
    %v120 = vld [vmem:[#allocation2 + $0x198] sm:$0xff]
    %v121 = vld [vmem:[#allocation2 + $0x1a0] sm:$0xff]
    %v122 = vld [vmem:[#allocation2 + $0x1a8] sm:$0xff]
    %v123 = vld [vmem:[#allocation2 + $0x1b0] sm:$0xff]
    %v124 = vld [vmem:[#allocation2 + $0x1b8] sm:$0xff]
    %v125 = vld [vmem:[#allocation2 + $0x1c0] sm:$0xff]
    %v126 = vld [vmem:[#allocation2 + $0x1c8] sm:$0xff]
    %v127 = vld [vmem:[#allocation2 + $0x1d0] sm:$0xff]
    %v128 = vld [vmem:[#allocation2 + $0x1d8] sm:$0xff]
    %v129 = vld [vmem:[#allocation2 + $0x1e0] sm:$0xff]
    %v130 = vld [vmem:[#allocation2 + $0x1e8] sm:$0xff]
    %v131 = vld [vmem:[#allocation2 + $0x1f0] sm:$0xff]
    %v132 = vld [vmem:[#allocation2 + $0x1f8] sm:$0xff]
    %v133 = vld [vmem:[#allocation2 + $0x200] sm:$0xff]
    %v134 = vld [vmem:[#allocation2 + $0x208] sm:$0xff]
    %v135 = vld [vmem:[#allocation2 + $0x210] sm:$0xff]
    %v136 = vld [vmem:[#allocation2 + $0x218] sm:$0xff]
    %v137 = vld [vmem:[#allocation2 + $0x220] sm:$0xff]
    %v138 = vld [vmem:[#allocation2 + $0x228] sm:$0xff]
    %v139 = vld [vmem:[#allocation2 + $0x230] sm:$0xff]
    %v140 = vld [vmem:[#allocation2 + $0x238] sm:$0xff]
    %v141 = vld [vmem:[#allocation2 + $0x240] sm:$0xff]
    %v142 = vld [vmem:[#allocation2 + $0x248] sm:$0xff]
    %v143 = vld [vmem:[#allocation2 + $0x250] sm:$0xff]
    %v144 = vld [vmem:[#allocation2 + $0x258] sm:$0xff]
    %v145 = vld [vmem:[#allocation2 + $0x260] sm:$0xff]
    %v146 = vld [vmem:[#allocation2 + $0x268] sm:$0xff]
    %v147 = vld [vmem:[#allocation2 + $0x270] sm:$0xff]
    %v148 = vld [vmem:[#allocation2 + $0x278] sm:$0xff]
    %v149 = vld [vmem:[#allocation2 + $0x280] sm:$0xff]
    %v150 = vld [vmem:[#allocation2 + $0x288] sm:$0xff]
    %v151 = vld [vmem:[#allocation2 + $0x290] sm:$0xff]
    %v152 = vld [vmem:[#allocation2 + $0x298] sm:$0xff]
    %v153 = vld [vmem:[#allocation2 + $0x2a0] sm:$0xff]
    %v154 = vld [vmem:[#allocation2 + $0x2a8] sm:$0xff]
    %v155 = vld [vmem:[#allocation2 + $0x2b0] sm:$0xff]
    %v156 = vld [vmem:[#allocation2 + $0x2b8] sm:$0xff]
    %v157 = vld [vmem:[#allocation2 + $0x2c0] sm:$0xff]
    %v158 = vld [vmem:[#allocation2 + $0x2c8] sm:$0xff]
    %v159 = vld [vmem:[#allocation2 + $0x2d0] sm:$0xff]
    %v160 = vld [vmem:[#allocation2 + $0x2d8] sm:$0xff]
    %v161 = vld [vmem:[#allocation2 + $0x2e0] sm:$0xff]
    %v162 = vld [vmem:[#allocation2 + $0x2e8] sm:$0xff]
    %v163 = vld [vmem:[#allocation2 + $0x2f0] sm:$0xff]
    %v164 = vld [vmem:[#allocation2 + $0x2f8] sm:$0xff]
    %v165 = vld [vmem:[#allocation2 + $0x300] sm:$0xff]
    %v166 = vld [vmem:[#allocation2 + $0x308] sm:$0xff]
    %v167 = vld [vmem:[#allocation2 + $0x310] sm:$0xff]
    %v168 = vld [vmem:[#allocation2 + $0x318] sm:$0xff]
    %v169 = vld [vmem:[#allocation2 + $0x320] sm:$0xff]
    %v170 = vld [vmem:[#allocation2 + $0x328] sm:$0xff]
    %v171 = vld [vmem:[#allocation2 + $0x330] sm:$0xff]
    %v172 = vld [vmem:[#allocation2 + $0x338] sm:$0xff]
    %v173 = vld [vmem:[#allocation2 + $0x340] sm:$0xff]
    %v174 = vld [vmem:[#allocation2 + $0x348] sm:$0xff]
    %v175 = vld [vmem:[#allocation2 + $0x350] sm:$0xff]
    %v176 = vld [vmem:[#allocation2 + $0x358] sm:$0xff]
    %v177 = vld [vmem:[#allocation2 + $0x360] sm:$0xff]
    %v178 = vld [vmem:[#allocation2 + $0x368] sm:$0xff]
    %v179 = vld [vmem:[#allocation2 + $0x370] sm:$0xff]
    %v180 = vld [vmem:[#allocation2 + $0x378] sm:$0xff]
    %v181 = vld [vmem:[#allocation2 + $0x380] sm:$0xff]
    %v182 = vld [vmem:[#allocation2 + $0x388] sm:$0xff]
    %v183 = vld [vmem:[#allocation2 + $0x390] sm:$0xff]
    %v184 = vld [vmem:[#allocation2 + $0x398] sm:$0xff]
    %v185 = vld [vmem:[#allocation2 + $0x3a0] sm:$0xff]
    %v186 = vld [vmem:[#allocation2 + $0x3a8] sm:$0xff]
    %v187 = vld [vmem:[#allocation2 + $0x3b0] sm:$0xff]
    %v188 = vld [vmem:[#allocation2 + $0x3b8] sm:$0xff]
    %v189 = vld [vmem:[#allocation2 + $0x3c0] sm:$0xff]
    %v190 = vld [vmem:[#allocation2 + $0x3c8] sm:$0xff]
    %v191 = vld [vmem:[#allocation2 + $0x3d0] sm:$0xff]
    %v192 = vld [vmem:[#allocation2 + $0x3d8] sm:$0xff]
    %v193 = vld [vmem:[#allocation2 + $0x3e0] sm:$0xff]
    %v194 = vld [vmem:[#allocation2 + $0x3e8] sm:$0xff]
    %v195 = vld [vmem:[#allocation2 + $0x3f0] sm:$0xff]
    %v196 = vld [vmem:[#allocation2 + $0x3f8] sm:$0xff]
    %v197 = vld [vmem:[#allocation2 + $0x400] sm:$0xff]
    %v198 = vld [vmem:[#allocation2 + $0x408] sm:$0xff]
    %v199 = vld [vmem:[#allocation2 + $0x410] sm:$0xff]
    %v200 = vld [vmem:[#allocation2 + $0x418] sm:$0xff]
    %v201 = vld [vmem:[#allocation2 + $0x420] sm:$0xff]
    %v202 = vld [vmem:[#allocation2 + $0x428] sm:$0xff]
    %v203 = vld [vmem:[#allocation2 + $0x430] sm:$0xff]
    %v204 = vld [vmem:[#allocation2 + $0x438] sm:$0xff]
    %v205 = vld [vmem:[#allocation2 + $0x440] sm:$0xff]
    %v206 = vld [vmem:[#allocation2 + $0x448] sm:$0xff]
    %v207 = vld [vmem:[#allocation2 + $0x450] sm:$0xff]
    %v208 = vld [vmem:[#allocation2 + $0x458] sm:$0xff]
    %v209 = vld [vmem:[#allocation2 + $0x460] sm:$0xff]
    %v210 = vld [vmem:[#allocation2 + $0x468] sm:$0xff]
    %v211 = vld [vmem:[#allocation2 + $0x470] sm:$0xff]
    %v212 = vld [vmem:[#allocation2 + $0x478] sm:$0xff]
    %v213 = vld [vmem:[#allocation2 + $0x480] sm:$0xff]
    %v214 = vld [vmem:[#allocation2 + $0x488] sm:$0xff]
    %v215 = vld [vmem:[#allocation2 + $0x490] sm:$0xff]
    %v216 = vld [vmem:[#allocation2 + $0x498] sm:$0xff]
    %v217 = vld [vmem:[#allocation2 + $0x4a0] sm:$0xff]
    %v218 = vld [vmem:[#allocation2 + $0x4a8] sm:$0xff]
    %v219 = vld [vmem:[#allocation2 + $0x4b0] sm:$0xff]
    %v220 = vld [vmem:[#allocation2 + $0x4b8] sm:$0xff]
    %v221 = vld [vmem:[#allocation2 + $0x4c0] sm:$0xff]
    %v222 = vld [vmem:[#allocation2 + $0x4c8] sm:$0xff]
    %v223 = vld [vmem:[#allocation2 + $0x4d0] sm:$0xff]
    %v224 = vld [vmem:[#allocation2 + $0x4d8] sm:$0xff]
    %v225 = vld [vmem:[#allocation2 + $0x4e0] sm:$0xff]
    %v226 = vld [vmem:[#allocation2 + $0x4e8] sm:$0xff]
    %v227 = vld [vmem:[#allocation2 + $0x4f0] sm:$0xff]
    %v228 = vld [vmem:[#allocation2 + $0x4f8] sm:$0xff]
    %v229 = vld [vmem:[#allocation2 + $0x500] sm:$0xff]
    %v230 = vld [vmem:[#allocation2 + $0x508] sm:$0xff]
    %v231 = vld [vmem:[#allocation2 + $0x510] sm:$0xff]
    %v232 = vld [vmem:[#allocation2 + $0x518] sm:$0xff]
    %v233 = vld [vmem:[#allocation2 + $0x520] sm:$0xff]
    %v234 = vld [vmem:[#allocation2 + $0x528] sm:$0xff]
    %v235 = vld [vmem:[#allocation2 + $0x530] sm:$0xff]
    %v236 = vld [vmem:[#allocation2 + $0x538] sm:$0xff]
    %v237 = vld [vmem:[#allocation2 + $0x540] sm:$0xff]
    %v238 = vld [vmem:[#allocation2 + $0x548] sm:$0xff]
    %v239 = vld [vmem:[#allocation2 + $0x550] sm:$0xff]
    %v240 = vld [vmem:[#allocation2 + $0x558] sm:$0xff]
    %v241 = vld [vmem:[#allocation2 + $0x560] sm:$0xff]
    %v242 = vld [vmem:[#allocation2 + $0x568] sm:$0xff]
    %v243 = vld [vmem:[#allocation2 + $0x570] sm:$0xff]
    %v244 = vld [vmem:[#allocation2 + $0x578] sm:$0xff]
    %v245 = vld [vmem:[#allocation2 + $0x580] sm:$0xff]
    %v246 = vld [vmem:[#allocation2 + $0x588] sm:$0xff]
    %v247 = vld [vmem:[#allocation2 + $0x590] sm:$0xff]
    %v248 = vld [vmem:[#allocation2 + $0x598] sm:$0xff]
    %v249 = vld [vmem:[#allocation2 + $0x5a0] sm:$0xff]
    %v250 = vld [vmem:[#allocation2 + $0x5a8] sm:$0xff]
    %v251 = vld [vmem:[#allocation2 + $0x5b0] sm:$0xff]
    %v252 = vld [vmem:[#allocation2 + $0x5b8] sm:$0xff]
    %v253 = vld [vmem:[#allocation2 + $0x5c0] sm:$0xff]
    %v254 = vld [vmem:[#allocation2 + $0x5c8] sm:$0xff]
    %v255 = vld [vmem:[#allocation2 + $0x5d0] sm:$0xff]
    %v256 = vld [vmem:[#allocation2 + $0x5d8] sm:$0xff]
    %v257 = vld [vmem:[#allocation2 + $0x5e0] sm:$0xff]
    %v258 = vld [vmem:[#allocation2 + $0x5e8] sm:$0xff]
    %v259 = vld [vmem:[#allocation2 + $0x5f0] sm:$0xff]
    %v260 = vld [vmem:[#allocation2 + $0x5f8] sm:$0xff]
    %v261 = vld [vmem:[#allocation2 + $0x600] sm:$0xff]
    %v262 = vld [vmem:[#allocation2 + $0x608] sm:$0xff]
    %v263 = vld [vmem:[#allocation2 + $0x610] sm:$0xff]
    %v264 = vld [vmem:[#allocation2 + $0x618] sm:$0xff]
    %v265 = vld [vmem:[%s3] sm:$0xf]
    %v267 = vlaneseq
    %v268 = vshrl.u32 %v267, 7
    %v269 = vsub.s32 0, %v268
    %v270 = vrot.slane %v265, %v269
    %v271 = vlaneseq
    %v272 = vshrl.u32 %v271, 7
    %v273 = vsub.s32 1, %v272
    %v274 = vrot.slane %v265, %v273
    %v275 = vlaneseq
    %v276 = vshrl.u32 %v275, 7
    %v277 = vsub.s32 2, %v276
    %v278 = vrot.slane %v265, %v277
    %v279 = vlaneseq
    %v280 = vshrl.u32 %v279, 7
    %v281 = vsub.s32 3, %v280
    %v282 = vrot.slane %v265, %v281
    %v483 = vunpack.c.l.b16 %v69
    %v484 = vunpack.c.h.b16 %v69
    %v485 = vunpack.c.l.b16 %v70
    %v486 = vunpack.c.h.b16 %v70
    %v487 = vunpack.c.l.b16 %v71
    %v488 = vunpack.c.h.b16 %v71
    %v489 = vunpack.c.l.b16 %v72
    %v490 = vunpack.c.h.b16 %v72
    %v491 = vunpack.c.l.b16 %v73
    %v492 = vunpack.c.h.b16 %v73
    %v493 = vunpack.c.l.b16 %v74
    %v494 = vunpack.c.h.b16 %v74
    %v495 = vunpack.c.l.b16 %v75
    %v496 = vunpack.c.h.b16 %v75
    %v497 = vunpack.c.l.b16 %v76
    %v498 = vunpack.c.h.b16 %v76
    %v499 = vunpack.c.l.b16 %v77
    %v500 = vunpack.c.h.b16 %v77
    %v501 = vunpack.c.l.b16 %v78
    %v502 = vunpack.c.h.b16 %v78
    %v503 = vunpack.c.l.b16 %v79
    %v504 = vunpack.c.h.b16 %v79
    %v505 = vunpack.c.l.b16 %v80
    %v506 = vunpack.c.h.b16 %v80
    %v507 = vunpack.c.l.b16 %v81
    %v508 = vunpack.c.h.b16 %v81
    %v509 = vunpack.c.l.b16 %v82
    %v510 = vunpack.c.h.b16 %v82
    %v511 = vunpack.c.l.b16 %v83
    %v512 = vunpack.c.h.b16 %v83
    %v513 = vunpack.c.l.b16 %v84
    %v514 = vunpack.c.h.b16 %v84
    %v515 = vunpack.c.l.b16 %v85
    %v516 = vunpack.c.h.b16 %v85
    %v517 = vunpack.c.l.b16 %v86
    %v518 = vunpack.c.h.b16 %v86
    %v519 = vunpack.c.l.b16 %v87
    %v520 = vunpack.c.h.b16 %v87
    %v521 = vunpack.c.l.b16 %v88
    %v522 = vunpack.c.h.b16 %v88
    %v523 = vunpack.c.l.b16 %v89
    %v524 = vunpack.c.h.b16 %v89
    %v525 = vunpack.c.l.b16 %v90
    %v526 = vunpack.c.h.b16 %v90
    %v527 = vunpack.c.l.b16 %v91
    %v528 = vunpack.c.h.b16 %v91
    %v529 = vunpack.c.l.b16 %v92
    %v530 = vunpack.c.h.b16 %v92
    %v531 = vunpack.c.l.b16 %v93
    %v532 = vunpack.c.h.b16 %v93
    %v533 = vunpack.c.l.b16 %v94
    %v534 = vunpack.c.h.b16 %v94
    %v535 = vunpack.c.l.b16 %v95
    %v536 = vunpack.c.h.b16 %v95
    %v537 = vunpack.c.l.b16 %v96
    %v538 = vunpack.c.h.b16 %v96
    %v539 = vunpack.c.l.b16 %v97
    %v540 = vunpack.c.h.b16 %v97
    %v541 = vunpack.c.l.b16 %v98
    %v542 = vunpack.c.h.b16 %v98
    %v543 = vunpack.c.l.b16 %v99
    %v544 = vunpack.c.h.b16 %v99
    %v545 = vunpack.c.l.b16 %v100
    %v546 = vunpack.c.h.b16 %v100
    %v547 = vunpack.c.l.b16 %v101
    %v548 = vunpack.c.h.b16 %v101
    %v549 = vunpack.c.l.b16 %v102
    %v550 = vunpack.c.h.b16 %v102
    %v551 = vunpack.c.l.b16 %v103
    %v552 = vunpack.c.h.b16 %v103
    %v553 = vunpack.c.l.b16 %v104
    %v554 = vunpack.c.h.b16 %v104
    %v555 = vunpack.c.l.b16 %v105
    %v556 = vunpack.c.h.b16 %v105
    %v557 = vunpack.c.l.b16 %v106
    %v558 = vunpack.c.h.b16 %v106
    %v559 = vunpack.c.l.b16 %v107
    %v560 = vunpack.c.h.b16 %v107
    %v561 = vunpack.c.l.b16 %v108
    %v562 = vunpack.c.h.b16 %v108
    %v563 = vunpack.c.l.b16 %v109
    %v564 = vunpack.c.h.b16 %v109
    %v565 = vunpack.c.l.b16 %v110
    %v566 = vunpack.c.h.b16 %v110
    %v567 = vunpack.c.l.b16 %v111
    %v568 = vunpack.c.h.b16 %v111
    %v569 = vunpack.c.l.b16 %v112
    %v570 = vunpack.c.h.b16 %v112
    %v571 = vunpack.c.l.b16 %v113
    %v572 = vunpack.c.h.b16 %v113
    %v573 = vunpack.c.l.b16 %v114
    %v574 = vunpack.c.h.b16 %v114
    %v575 = vunpack.c.l.b16 %v115
    %v576 = vunpack.c.h.b16 %v115
    %v577 = vunpack.c.l.b16 %v116
    %v578 = vunpack.c.h.b16 %v116
    %v579 = vunpack.c.l.b16 %v117
    %v580 = vunpack.c.h.b16 %v117
    %v581 = vunpack.c.l.b16 %v118
    %v582 = vunpack.c.h.b16 %v118
    %v583 = vunpack.c.l.b16 %v119
    %v584 = vunpack.c.h.b16 %v119
    %v585 = vunpack.c.l.b16 %v120
    %v586 = vunpack.c.h.b16 %v120
    %v587 = vunpack.c.l.b16 %v121
    %v588 = vunpack.c.h.b16 %v121
    %v589 = vunpack.c.l.b16 %v122
    %v590 = vunpack.c.h.b16 %v122
    %v591 = vunpack.c.l.b16 %v123
    %v592 = vunpack.c.h.b16 %v123
    %v593 = vunpack.c.l.b16 %v124
    %v594 = vunpack.c.h.b16 %v124
    %v595 = vunpack.c.l.b16 %v125
    %v596 = vunpack.c.h.b16 %v125
    %v597 = vunpack.c.l.b16 %v126
    %v598 = vunpack.c.h.b16 %v126
    %v599 = vunpack.c.l.b16 %v127
    %v600 = vunpack.c.h.b16 %v127
    %v601 = vunpack.c.l.b16 %v128
    %v602 = vunpack.c.h.b16 %v128
    %v603 = vunpack.c.l.b16 %v129
    %v604 = vunpack.c.h.b16 %v129
    %v605 = vunpack.c.l.b16 %v130
    %v606 = vunpack.c.h.b16 %v130
    %v607 = vunpack.c.l.b16 %v131
    %v608 = vunpack.c.h.b16 %v131
    %v609 = vunpack.c.l.b16 %v132
    %v610 = vunpack.c.h.b16 %v132
    %v611 = vunpack.c.l.b16 %v133
    %v612 = vunpack.c.h.b16 %v133
    %v613 = vunpack.c.l.b16 %v134
    %v614 = vunpack.c.h.b16 %v134
    %v615 = vunpack.c.l.b16 %v135
    %v616 = vunpack.c.h.b16 %v135
    %v617 = vunpack.c.l.b16 %v136
    %v618 = vunpack.c.h.b16 %v136
    %v619 = vunpack.c.l.b16 %v137
    %v620 = vunpack.c.h.b16 %v137
    %v621 = vunpack.c.l.b16 %v138
    %v622 = vunpack.c.h.b16 %v138
    %v623 = vunpack.c.l.b16 %v139
    %v624 = vunpack.c.h.b16 %v139
    %v625 = vunpack.c.l.b16 %v140
    %v626 = vunpack.c.h.b16 %v140
    %v627 = vunpack.c.l.b16 %v141
    %v628 = vunpack.c.h.b16 %v141
    %v629 = vunpack.c.l.b16 %v142
    %v630 = vunpack.c.h.b16 %v142
    %v631 = vunpack.c.l.b16 %v143
    %v632 = vunpack.c.h.b16 %v143
    %v633 = vunpack.c.l.b16 %v144
    %v634 = vunpack.c.h.b16 %v144
    %v635 = vunpack.c.l.b16 %v145
    %v636 = vunpack.c.h.b16 %v145
    %v637 = vunpack.c.l.b16 %v146
    %v638 = vunpack.c.h.b16 %v146
    %v639 = vunpack.c.l.b16 %v147
    %v640 = vunpack.c.h.b16 %v147
    %v641 = vunpack.c.l.b16 %v148
    %v642 = vunpack.c.h.b16 %v148
    %v643 = vunpack.c.l.b16 %v149
    %v644 = vunpack.c.h.b16 %v149
    %v645 = vunpack.c.l.b16 %v150
    %v646 = vunpack.c.h.b16 %v150
    %v647 = vunpack.c.l.b16 %v151
    %v648 = vunpack.c.h.b16 %v151
    %v649 = vunpack.c.l.b16 %v152
    %v650 = vunpack.c.h.b16 %v152
    %v651 = vunpack.c.l.b16 %v153
    %v652 = vunpack.c.h.b16 %v153
    %v653 = vunpack.c.l.b16 %v154
    %v654 = vunpack.c.h.b16 %v154
    %v655 = vunpack.c.l.b16 %v155
    %v656 = vunpack.c.h.b16 %v155
    %v657 = vunpack.c.l.b16 %v156
    %v658 = vunpack.c.h.b16 %v156
    %v659 = vunpack.c.l.b16 %v157
    %v660 = vunpack.c.h.b16 %v157
    %v661 = vunpack.c.l.b16 %v158
    %v662 = vunpack.c.h.b16 %v158
    %v663 = vunpack.c.l.b16 %v159
    %v664 = vunpack.c.h.b16 %v159
    %v665 = vunpack.c.l.b16 %v160
    %v666 = vunpack.c.h.b16 %v160
    %v667 = vunpack.c.l.b16 %v161
    %v668 = vunpack.c.h.b16 %v161
    %v669 = vunpack.c.l.b16 %v162
    %v670 = vunpack.c.h.b16 %v162
    %v671 = vunpack.c.l.b16 %v163
    %v672 = vunpack.c.h.b16 %v163
    %v673 = vunpack.c.l.b16 %v164
    %v674 = vunpack.c.h.b16 %v164
    %v675 = vunpack.c.l.b16 %v165
    %v676 = vunpack.c.h.b16 %v165
    %v677 = vunpack.c.l.b16 %v166
    %v678 = vunpack.c.h.b16 %v166
    %v679 = vunpack.c.l.b16 %v167
    %v680 = vunpack.c.h.b16 %v167
    %v681 = vunpack.c.l.b16 %v168
    %v682 = vunpack.c.h.b16 %v168
    %v683 = vunpack.c.l.b16 %v169
    %v684 = vunpack.c.h.b16 %v169
    %v685 = vunpack.c.l.b16 %v170
    %v686 = vunpack.c.h.b16 %v170
    %v687 = vunpack.c.l.b16 %v171
    %v688 = vunpack.c.h.b16 %v171
    %v689 = vunpack.c.l.b16 %v172
    %v690 = vunpack.c.h.b16 %v172
    %v691 = vunpack.c.l.b16 %v173
    %v692 = vunpack.c.h.b16 %v173
    %v693 = vunpack.c.l.b16 %v174
    %v694 = vunpack.c.h.b16 %v174
    %v695 = vunpack.c.l.b16 %v175
    %v696 = vunpack.c.h.b16 %v175
    %v697 = vunpack.c.l.b16 %v176
    %v698 = vunpack.c.h.b16 %v176
    %v699 = vunpack.c.l.b16 %v177
    %v700 = vunpack.c.h.b16 %v177
    %v701 = vunpack.c.l.b16 %v178
    %v702 = vunpack.c.h.b16 %v178
    %v703 = vunpack.c.l.b16 %v179
    %v704 = vunpack.c.h.b16 %v179
    %v705 = vunpack.c.l.b16 %v180
    %v706 = vunpack.c.h.b16 %v180
    %v707 = vunpack.c.l.b16 %v181
    %v708 = vunpack.c.h.b16 %v181
    %v709 = vunpack.c.l.b16 %v182
    %v710 = vunpack.c.h.b16 %v182
    %v711 = vunpack.c.l.b16 %v183
    %v712 = vunpack.c.h.b16 %v183
    %v713 = vunpack.c.l.b16 %v184
    %v714 = vunpack.c.h.b16 %v184
    %v715 = vunpack.c.l.b16 %v185
    %v716 = vunpack.c.h.b16 %v185
    %v717 = vunpack.c.l.b16 %v186
    %v718 = vunpack.c.h.b16 %v186
    %v719 = vunpack.c.l.b16 %v187
    %v720 = vunpack.c.h.b16 %v187
    %v721 = vunpack.c.l.b16 %v188
    %v722 = vunpack.c.h.b16 %v188
    %v723 = vunpack.c.l.b16 %v189
    %v724 = vunpack.c.h.b16 %v189
    %v725 = vunpack.c.l.b16 %v190
    %v726 = vunpack.c.h.b16 %v190
    %v727 = vunpack.c.l.b16 %v191
    %v728 = vunpack.c.h.b16 %v191
    %v729 = vunpack.c.l.b16 %v192
    %v730 = vunpack.c.h.b16 %v192
    %v731 = vunpack.c.l.b16 %v193
    %v732 = vunpack.c.h.b16 %v193
    %v733 = vunpack.c.l.b16 %v194
    %v734 = vunpack.c.h.b16 %v194
    %v735 = vunpack.c.l.b16 %v195
    %v736 = vunpack.c.h.b16 %v195
    %v737 = vunpack.c.l.b16 %v196
    %v738 = vunpack.c.h.b16 %v196
    %v739 = vunpack.c.l.b16 %v197
    %v740 = vunpack.c.h.b16 %v197
    %v741 = vunpack.c.l.b16 %v198
    %v742 = vunpack.c.h.b16 %v198
    %v743 = vunpack.c.l.b16 %v199
    %v744 = vunpack.c.h.b16 %v199
    %v745 = vunpack.c.l.b16 %v200
    %v746 = vunpack.c.h.b16 %v200
    %v747 = vunpack.c.l.b16 %v201
    %v748 = vunpack.c.h.b16 %v201
    %v749 = vunpack.c.l.b16 %v202
    %v750 = vunpack.c.h.b16 %v202
    %v751 = vunpack.c.l.b16 %v203
    %v752 = vunpack.c.h.b16 %v203
    %v753 = vunpack.c.l.b16 %v204
    %v754 = vunpack.c.h.b16 %v204
    %v755 = vunpack.c.l.b16 %v205
    %v756 = vunpack.c.h.b16 %v205
    %v757 = vunpack.c.l.b16 %v206
    %v758 = vunpack.c.h.b16 %v206
    %v759 = vunpack.c.l.b16 %v207
    %v760 = vunpack.c.h.b16 %v207
    %v761 = vunpack.c.l.b16 %v208
    %v762 = vunpack.c.h.b16 %v208
    %v763 = vunpack.c.l.b16 %v209
    %v764 = vunpack.c.h.b16 %v209
    %v765 = vunpack.c.l.b16 %v210
    %v766 = vunpack.c.h.b16 %v210
    %v767 = vunpack.c.l.b16 %v211
    %v768 = vunpack.c.h.b16 %v211
    %v769 = vunpack.c.l.b16 %v212
    %v770 = vunpack.c.h.b16 %v212
    %v771 = vunpack.c.l.b16 %v213
    %v772 = vunpack.c.h.b16 %v213
    %v773 = vunpack.c.l.b16 %v214
    %v774 = vunpack.c.h.b16 %v214
    %v775 = vunpack.c.l.b16 %v215
    %v776 = vunpack.c.h.b16 %v215
    %v777 = vunpack.c.l.b16 %v216
    %v778 = vunpack.c.h.b16 %v216
    %v779 = vunpack.c.l.b16 %v217
    %v780 = vunpack.c.h.b16 %v217
    %v781 = vunpack.c.l.b16 %v218
    %v782 = vunpack.c.h.b16 %v218
    %v783 = vunpack.c.l.b16 %v219
    %v784 = vunpack.c.h.b16 %v219
    %v785 = vunpack.c.l.b16 %v220
    %v786 = vunpack.c.h.b16 %v220
    %v787 = vunpack.c.l.b16 %v221
    %v788 = vunpack.c.h.b16 %v221
    %v789 = vunpack.c.l.b16 %v222
    %v790 = vunpack.c.h.b16 %v222
    %v791 = vunpack.c.l.b16 %v223
    %v792 = vunpack.c.h.b16 %v223
    %v793 = vunpack.c.l.b16 %v224
    %v794 = vunpack.c.h.b16 %v224
    %v795 = vunpack.c.l.b16 %v225
    %v796 = vunpack.c.h.b16 %v225
    %v797 = vunpack.c.l.b16 %v226
    %v798 = vunpack.c.h.b16 %v226
    %v799 = vunpack.c.l.b16 %v227
    %v800 = vunpack.c.h.b16 %v227
    %v801 = vunpack.c.l.b16 %v228
    %v802 = vunpack.c.h.b16 %v228
    %v803 = vunpack.c.l.b16 %v229
    %v804 = vunpack.c.h.b16 %v229
    %v805 = vunpack.c.l.b16 %v230
    %v806 = vunpack.c.h.b16 %v230
    %v807 = vunpack.c.l.b16 %v231
    %v808 = vunpack.c.h.b16 %v231
    %v809 = vunpack.c.l.b16 %v232
    %v810 = vunpack.c.h.b16 %v232
    %v811 = vunpack.c.l.b16 %v233
    %v812 = vunpack.c.h.b16 %v233
    %v813 = vunpack.c.l.b16 %v234
    %v814 = vunpack.c.h.b16 %v234
    %v815 = vunpack.c.l.b16 %v235
    %v816 = vunpack.c.h.b16 %v235
    %v817 = vunpack.c.l.b16 %v236
    %v818 = vunpack.c.h.b16 %v236
    %v819 = vunpack.c.l.b16 %v237
    %v820 = vunpack.c.h.b16 %v237
    %v821 = vunpack.c.l.b16 %v238
    %v822 = vunpack.c.h.b16 %v238
    %v823 = vunpack.c.l.b16 %v239
    %v824 = vunpack.c.h.b16 %v239
    %v825 = vunpack.c.l.b16 %v240
    %v826 = vunpack.c.h.b16 %v240
    %v827 = vunpack.c.l.b16 %v241
    %v828 = vunpack.c.h.b16 %v241
    %v829 = vunpack.c.l.b16 %v242
    %v830 = vunpack.c.h.b16 %v242
    %v831 = vunpack.c.l.b16 %v243
    %v832 = vunpack.c.h.b16 %v243
    %v833 = vunpack.c.l.b16 %v244
    %v834 = vunpack.c.h.b16 %v244
    %v835 = vunpack.c.l.b16 %v245
    %v836 = vunpack.c.h.b16 %v245
    %v837 = vunpack.c.l.b16 %v246
    %v838 = vunpack.c.h.b16 %v246
    %v839 = vunpack.c.l.b16 %v247
    %v840 = vunpack.c.h.b16 %v247
    %v841 = vunpack.c.l.b16 %v248
    %v842 = vunpack.c.h.b16 %v248
    %v843 = vunpack.c.l.b16 %v249
    %v844 = vunpack.c.h.b16 %v249
    %v845 = vunpack.c.l.b16 %v250
    %v846 = vunpack.c.h.b16 %v250
    %v847 = vunpack.c.l.b16 %v251
    %v848 = vunpack.c.h.b16 %v251
    %v849 = vunpack.c.l.b16 %v252
    %v850 = vunpack.c.h.b16 %v252
    %v851 = vunpack.c.l.b16 %v253
    %v852 = vunpack.c.h.b16 %v253
    %v853 = vunpack.c.l.b16 %v254
    %v854 = vunpack.c.h.b16 %v254
    %v855 = vunpack.c.l.b16 %v255
    %v856 = vunpack.c.h.b16 %v255
    %v857 = vunpack.c.l.b16 %v256
    %v858 = vunpack.c.h.b16 %v256
    %v859 = vunpack.c.l.b16 %v257
    %v860 = vunpack.c.h.b16 %v257
    %v861 = vunpack.c.l.b16 %v258
    %v862 = vunpack.c.h.b16 %v258
    %v863 = vunpack.c.l.b16 %v259
    %v864 = vunpack.c.h.b16 %v259
    %v865 = vunpack.c.l.b16 %v260
    %v866 = vunpack.c.h.b16 %v260
    %v867 = vunpack.c.l.b16 %v261
    %v868 = vunpack.c.h.b16 %v261
    %v869 = vunpack.c.l.b16 %v262
    %v870 = vunpack.c.h.b16 %v262
    %v871 = vunpack.c.l.b16 %v263
    %v872 = vunpack.c.h.b16 %v263
    %v873 = vunpack.c.l.b16 %v264
    %v874 = vunpack.c.h.b16 %v264
    %v875 = vpack.c.b16 %v487, %v483
    %v876 = vpack.c.b16 %v488, %v484
    %v877 = vpack.c.b16 %v489, %v485
    %v878 = vpack.c.b16 %v490, %v486
    %v879 = vpack.c.b16 %v495, %v491
    %v880 = vpack.c.b16 %v496, %v492
    %v881 = vpack.c.b16 %v497, %v493
    %v882 = vpack.c.b16 %v498, %v494
    %v883 = vpack.c.b16 %v503, %v499
    %v884 = vpack.c.b16 %v504, %v500
    %v885 = vpack.c.b16 %v505, %v501
    %v886 = vpack.c.b16 %v506, %v502
    %v887 = vpack.c.b16 %v511, %v507
    %v888 = vpack.c.b16 %v512, %v508
    %v889 = vpack.c.b16 %v513, %v509
    %v890 = vpack.c.b16 %v514, %v510
    %v891 = vpack.c.b16 %v519, %v515
    %v892 = vpack.c.b16 %v520, %v516
    %v893 = vpack.c.b16 %v521, %v517
    %v894 = vpack.c.b16 %v522, %v518
    %v895 = vpack.c.b16 %v527, %v523
    %v896 = vpack.c.b16 %v528, %v524
    %v897 = vpack.c.b16 %v529, %v525
    %v898 = vpack.c.b16 %v530, %v526
    %v899 = vpack.c.b16 %v535, %v531
    %v900 = vpack.c.b16 %v536, %v532
    %v901 = vpack.c.b16 %v537, %v533
    %v902 = vpack.c.b16 %v538, %v534
    %v903 = vpack.c.b16 %v543, %v539
    %v904 = vpack.c.b16 %v544, %v540
    %v905 = vpack.c.b16 %v545, %v541
    %v906 = vpack.c.b16 %v546, %v542
    %v907 = vpack.c.b16 %v551, %v547
    %v908 = vpack.c.b16 %v552, %v548
    %v909 = vpack.c.b16 %v553, %v549
    %v910 = vpack.c.b16 %v554, %v550
    %v911 = vpack.c.b16 %v559, %v555
    %v912 = vpack.c.b16 %v560, %v556
    %v913 = vpack.c.b16 %v561, %v557
    %v914 = vpack.c.b16 %v562, %v558
    %v915 = vpack.c.b16 %v567, %v563
    %v916 = vpack.c.b16 %v568, %v564
    %v917 = vpack.c.b16 %v569, %v565
    %v918 = vpack.c.b16 %v570, %v566
    %v919 = vpack.c.b16 %v575, %v571
    %v920 = vpack.c.b16 %v576, %v572
    %v921 = vpack.c.b16 %v577, %v573
    %v922 = vpack.c.b16 %v578, %v574
    %v923 = vpack.c.b16 %v583, %v579
    %v924 = vpack.c.b16 %v584, %v580
    %v925 = vpack.c.b16 %v585, %v581
    %v926 = vpack.c.b16 %v586, %v582
    %v927 = vpack.c.b16 %v591, %v587
    %v928 = vpack.c.b16 %v592, %v588
    %v929 = vpack.c.b16 %v593, %v589
    %v930 = vpack.c.b16 %v594, %v590
    %v931 = vpack.c.b16 %v599, %v595
    %v932 = vpack.c.b16 %v600, %v596
    %v933 = vpack.c.b16 %v601, %v597
    %v934 = vpack.c.b16 %v602, %v598
    %v935 = vpack.c.b16 %v607, %v603
    %v936 = vpack.c.b16 %v608, %v604
    %v937 = vpack.c.b16 %v609, %v605
    %v938 = vpack.c.b16 %v610, %v606
    %v939 = vpack.c.b16 %v615, %v611
    %v940 = vpack.c.b16 %v616, %v612
    %v941 = vpack.c.b16 %v617, %v613
    %v942 = vpack.c.b16 %v618, %v614
    %v943 = vpack.c.b16 %v623, %v619
    %v944 = vpack.c.b16 %v624, %v620
    %v945 = vpack.c.b16 %v625, %v621
    %v946 = vpack.c.b16 %v626, %v622
    %v947 = vpack.c.b16 %v631, %v627
    %v948 = vpack.c.b16 %v632, %v628
    %v949 = vpack.c.b16 %v633, %v629
    %v950 = vpack.c.b16 %v634, %v630
    %v951 = vpack.c.b16 %v639, %v635
    %v952 = vpack.c.b16 %v640, %v636
    %v953 = vpack.c.b16 %v641, %v637
    %v954 = vpack.c.b16 %v642, %v638
    %v955 = vpack.c.b16 %v647, %v643
    %v956 = vpack.c.b16 %v648, %v644
    %v957 = vpack.c.b16 %v649, %v645
    %v958 = vpack.c.b16 %v650, %v646
    %v959 = vpack.c.b16 %v655, %v651
    %v960 = vpack.c.b16 %v656, %v652
    %v961 = vpack.c.b16 %v657, %v653
    %v962 = vpack.c.b16 %v658, %v654
    %v963 = vpack.c.b16 %v663, %v659
    %v964 = vpack.c.b16 %v664, %v660
    %v965 = vpack.c.b16 %v665, %v661
    %v966 = vpack.c.b16 %v666, %v662
    %v967 = vpack.c.b16 %v671, %v667
    %v968 = vpack.c.b16 %v672, %v668
    %v969 = vpack.c.b16 %v673, %v669
    %v970 = vpack.c.b16 %v674, %v670
    %v971 = vpack.c.b16 %v679, %v675
    %v972 = vpack.c.b16 %v680, %v676
    %v973 = vpack.c.b16 %v681, %v677
    %v974 = vpack.c.b16 %v682, %v678
    %v975 = vpack.c.b16 %v687, %v683
    %v976 = vpack.c.b16 %v688, %v684
    %v977 = vpack.c.b16 %v689, %v685
    %v978 = vpack.c.b16 %v690, %v686
    %v979 = vpack.c.b16 %v695, %v691
    %v980 = vpack.c.b16 %v696, %v692
    %v981 = vpack.c.b16 %v697, %v693
    %v982 = vpack.c.b16 %v698, %v694
    %v983 = vpack.c.b16 %v703, %v699
    %v984 = vpack.c.b16 %v704, %v700
    %v985 = vpack.c.b16 %v705, %v701
    %v986 = vpack.c.b16 %v706, %v702
    %v987 = vpack.c.b16 %v711, %v707
    %v988 = vpack.c.b16 %v712, %v708
    %v989 = vpack.c.b16 %v713, %v709
    %v990 = vpack.c.b16 %v714, %v710
    %v991 = vpack.c.b16 %v719, %v715
    %v992 = vpack.c.b16 %v720, %v716
    %v993 = vpack.c.b16 %v721, %v717
    %v994 = vpack.c.b16 %v722, %v718
    %v995 = vpack.c.b16 %v727, %v723
    %v996 = vpack.c.b16 %v728, %v724
    %v997 = vpack.c.b16 %v729, %v725
    %v998 = vpack.c.b16 %v730, %v726
    %v999 = vpack.c.b16 %v735, %v731
    %v1000 = vpack.c.b16 %v736, %v732
    %v1001 = vpack.c.b16 %v737, %v733
    %v1002 = vpack.c.b16 %v738, %v734
    %v1003 = vpack.c.b16 %v743, %v739
    %v1004 = vpack.c.b16 %v744, %v740
    %v1005 = vpack.c.b16 %v745, %v741
    %v1006 = vpack.c.b16 %v746, %v742
    %v1007 = vpack.c.b16 %v751, %v747
    %v1008 = vpack.c.b16 %v752, %v748
    %v1009 = vpack.c.b16 %v753, %v749
    %v1010 = vpack.c.b16 %v754, %v750
    %v1011 = vpack.c.b16 %v759, %v755
    %v1012 = vpack.c.b16 %v760, %v756
    %v1013 = vpack.c.b16 %v761, %v757
    %v1014 = vpack.c.b16 %v762, %v758
    %v1015 = vpack.c.b16 %v767, %v763
    %v1016 = vpack.c.b16 %v768, %v764
    %v1017 = vpack.c.b16 %v769, %v765
    %v1018 = vpack.c.b16 %v770, %v766
    %v1019 = vpack.c.b16 %v775, %v771
    %v1020 = vpack.c.b16 %v776, %v772
    %v1021 = vpack.c.b16 %v777, %v773
    %v1022 = vpack.c.b16 %v778, %v774
    %v1023 = vpack.c.b16 %v783, %v779
    %v1024 = vpack.c.b16 %v784, %v780
    %v1025 = vpack.c.b16 %v785, %v781
    %v1026 = vpack.c.b16 %v786, %v782
    %v1027 = vpack.c.b16 %v791, %v787
    %v1028 = vpack.c.b16 %v792, %v788
    %v1029 = vpack.c.b16 %v793, %v789
    %v1030 = vpack.c.b16 %v794, %v790
    %v1031 = vpack.c.b16 %v799, %v795
    %v1032 = vpack.c.b16 %v800, %v796
    %v1033 = vpack.c.b16 %v801, %v797
    %v1034 = vpack.c.b16 %v802, %v798
    %v1035 = vpack.c.b16 %v807, %v803
    %v1036 = vpack.c.b16 %v808, %v804
    %v1037 = vpack.c.b16 %v809, %v805
    %v1038 = vpack.c.b16 %v810, %v806
    %v1039 = vpack.c.b16 %v815, %v811
    %v1040 = vpack.c.b16 %v816, %v812
    %v1041 = vpack.c.b16 %v817, %v813
    %v1042 = vpack.c.b16 %v818, %v814
    %v1043 = vpack.c.b16 %v823, %v819
    %v1044 = vpack.c.b16 %v824, %v820
    %v1045 = vpack.c.b16 %v825, %v821
    %v1046 = vpack.c.b16 %v826, %v822
    %v1047 = vpack.c.b16 %v831, %v827
    %v1048 = vpack.c.b16 %v832, %v828
    %v1049 = vpack.c.b16 %v833, %v829
    %v1050 = vpack.c.b16 %v834, %v830
    %v1051 = vpack.c.b16 %v839, %v835
    %v1052 = vpack.c.b16 %v840, %v836
    %v1053 = vpack.c.b16 %v841, %v837
    %v1054 = vpack.c.b16 %v842, %v838
    %v1055 = vpack.c.b16 %v847, %v843
    %v1056 = vpack.c.b16 %v848, %v844
    %v1057 = vpack.c.b16 %v849, %v845
    %v1058 = vpack.c.b16 %v850, %v846
    %v1059 = vpack.c.b16 %v855, %v851
    %v1060 = vpack.c.b16 %v856, %v852
    %v1061 = vpack.c.b16 %v857, %v853
    %v1062 = vpack.c.b16 %v858, %v854
    %v1063 = vpack.c.b16 %v863, %v859
    %v1064 = vpack.c.b16 %v864, %v860
    %v1065 = vpack.c.b16 %v865, %v861
    %v1066 = vpack.c.b16 %v866, %v862
    %v1067 = vpack.c.b16 %v871, %v867
    %v1068 = vpack.c.b16 %v872, %v868
    %v1069 = vpack.c.b16 %v873, %v869
    %v1070 = vpack.c.b16 %v874, %v870
    %vm1267 = vcmask 130048
    %v1269 = vsel %vm1267, %v68, 0
    %1271 = vmatprep.subr.bf16.mxu0 %v876
    %1272 = vmatpush1.bf16.msra.mxu0 %v875
    %1273 = vmatprep.subr.bf16.mxu0 %v880
    %1274 = vmatpush1.bf16.msra.mxu0 %v879
    %1275 = vmatprep.subr.bf16.mxu0 %v884
    %1276 = vmatpush1.bf16.msra.mxu0 %v883
    %1277 = vmatprep.subr.bf16.mxu0 %v888
    %1278 = vmatpush1.bf16.msra.mxu0 %v887
    %1279 = vmatprep.subr.bf16.mxu0 %v892
    %1280 = vmatpush1.bf16.msra.mxu0 %v891
    %1281 = vmatprep.subr.bf16.mxu0 %v896
    %1282 = vmatpush1.bf16.msra.mxu0 %v895
    %1283 = vmatprep.subr.bf16.mxu0 %v900
    %1284 = vmatpush1.bf16.msra.mxu0 %v899
    %1285 = vmatprep.subr.bf16.mxu0 %v904
    %1286 = vmatpush1.bf16.msra.mxu0 %v903
    %1287 = vmatprep.subr.bf16.mxu0 %v908
    %1288 = vmatpush1.bf16.msra.mxu0 %v907
    %1289 = vmatprep.subr.bf16.mxu0 %v912
    %1290 = vmatpush1.bf16.msra.mxu0 %v911
    %1291 = vmatprep.subr.bf16.mxu0 %v916
    %1292 = vmatpush1.bf16.msra.mxu0 %v915
    %1293 = vmatprep.subr.bf16.mxu0 %v920
    %1294 = vmatpush1.bf16.msra.mxu0 %v919
    %1295 = vmatprep.subr.bf16.mxu0 %v924
    %1296 = vmatpush1.bf16.msra.mxu0 %v923
    %1297 = vmatprep.subr.bf16.mxu0 %v928
    %1298 = vmatpush1.bf16.msra.mxu0 %v927
    %1299 = vmatprep.subr.bf16.mxu0 %v932
    %1300 = vmatpush1.bf16.msra.mxu0 %v931
    %1301 = vmatprep.subr.bf16.mxu0 %v936
    %1302 = vmatpush1.bf16.msra.mxu0 %v935
    %1303 = vmatprep.mubr.bf16.mxu0 %v63
    %1304 = vmatmul.mubr.bf16.gmra.mrb[0].mxu0 %v62
    %v1305 = vpop.f32.mrb[0].mxu0
    %v1306 = vadd.f32 %v270, %v1305
    %v1307 = vpop.f32.mrb[0].mxu0
    %v1308 = vadd.f32 %v274, %v1307
    %v1309 = vpop.f32.mrb[0].mxu0
    %v1310 = vpop.f32.mrb[0].mxu0
    %1311 = vdwg.mxu0
    %1312 = vmatprep.subr.bf16.mxu0 %v940
    %1313 = vmatpush1.bf16.msra.mxu0 %v939
    %1314 = vmatprep.subr.bf16.mxu0 %v944
    %1315 = vmatpush1.bf16.msra.mxu0 %v943
    %1316 = vmatprep.subr.bf16.mxu0 %v948
    %1317 = vmatpush1.bf16.msra.mxu0 %v947
    %1318 = vmatprep.subr.bf16.mxu0 %v952
    %1319 = vmatpush1.bf16.msra.mxu0 %v951
    %1320 = vmatprep.subr.bf16.mxu0 %v956
    %1321 = vmatpush1.bf16.msra.mxu0 %v955
    %1322 = vmatprep.subr.bf16.mxu0 %v960
    %1323 = vmatpush1.bf16.msra.mxu0 %v959
    %1324 = vmatprep.subr.bf16.mxu0 %v964
    %1325 = vmatpush1.bf16.msra.mxu0 %v963
    %1326 = vmatprep.subr.bf16.mxu0 %v968
    %1327 = vmatpush1.bf16.msra.mxu0 %v967
    %1328 = vmatprep.subr.bf16.mxu0 %v972
    %1329 = vmatpush1.bf16.msra.mxu0 %v971
    %1330 = vmatprep.subr.bf16.mxu0 %v976
    %1331 = vmatpush1.bf16.msra.mxu0 %v975
    %1332 = vmatprep.subr.bf16.mxu0 %v980
    %1333 = vmatpush1.bf16.msra.mxu0 %v979
    %1334 = vmatprep.subr.bf16.mxu0 %v984
    %1335 = vmatpush1.bf16.msra.mxu0 %v983
    %1336 = vmatprep.subr.bf16.mxu0 %v988
    %1337 = vmatpush1.bf16.msra.mxu0 %v987
    %1338 = vmatprep.subr.bf16.mxu0 %v992
    %1339 = vmatpush1.bf16.msra.mxu0 %v991
    %1340 = vmatprep.subr.bf16.mxu0 %v996
    %1341 = vmatpush1.bf16.msra.mxu0 %v995
    %1342 = vmatprep.subr.bf16.mxu0 %v1000
    %1343 = vmatpush1.bf16.msra.mxu0 %v999
    %1344 = vmatprep.mubr.bf16.mxu0 %v65
    %1345 = vmatmul.mubr.bf16.gmra.mrb[0].mxu0 %v64
    %v1346 = vpop.f32.mrb[0].mxu0
    %v1347 = vadd.f32 %v1306, %v1346
    %v1348 = vpop.f32.mrb[0].mxu0
    %v1349 = vadd.f32 %v1308, %v1348
    %v1350 = vpop.f32.mrb[0].mxu0
    %v1351 = vpop.f32.mrb[0].mxu0
    %1352 = vdwg.mxu0
    %1353 = vmatprep.subr.bf16.mxu0 %v1004
    %1354 = vmatpush1.bf16.msra.mxu0 %v1003
    %1355 = vmatprep.subr.bf16.mxu0 %v1008
    %1356 = vmatpush1.bf16.msra.mxu0 %v1007
    %1357 = vmatprep.subr.bf16.mxu0 %v1012
    %1358 = vmatpush1.bf16.msra.mxu0 %v1011
    %1359 = vmatprep.subr.bf16.mxu0 %v1016
    %1360 = vmatpush1.bf16.msra.mxu0 %v1015
    %1361 = vmatprep.subr.bf16.mxu0 %v1020
    %1362 = vmatpush1.bf16.msra.mxu0 %v1019
    %1363 = vmatprep.subr.bf16.mxu0 %v1024
    %1364 = vmatpush1.bf16.msra.mxu0 %v1023
    %1365 = vmatprep.subr.bf16.mxu0 %v1028
    %1366 = vmatpush1.bf16.msra.mxu0 %v1027
    %1367 = vmatprep.subr.bf16.mxu0 %v1032
    %1368 = vmatpush1.bf16.msra.mxu0 %v1031
    %1369 = vmatprep.subr.bf16.mxu0 %v1036
    %1370 = vmatpush1.bf16.msra.mxu0 %v1035
    %1371 = vmatprep.subr.bf16.mxu0 %v1040
    %1372 = vmatpush1.bf16.msra.mxu0 %v1039
    %1373 = vmatprep.subr.bf16.mxu0 %v1044
    %1374 = vmatpush1.bf16.msra.mxu0 %v1043
    %1375 = vmatprep.subr.bf16.mxu0 %v1048
    %1376 = vmatpush1.bf16.msra.mxu0 %v1047
    %1377 = vmatprep.subr.bf16.mxu0 %v1052
    %1378 = vmatpush1.bf16.msra.mxu0 %v1051
    %1379 = vmatprep.subr.bf16.mxu0 %v1056
    %1380 = vmatpush1.bf16.msra.mxu0 %v1055
    %1381 = vmatprep.subr.bf16.mxu0 %v1060
    %1382 = vmatpush1.bf16.msra.mxu0 %v1059
    %1383 = vmatprep.subr.bf16.mxu0 %v1064
    %1384 = vmatpush1.bf16.msra.mxu0 %v1063
    %1385 = vmatprep.mubr.bf16.mxu0 %v67
    %1386 = vmatmul.mubr.bf16.gmra.mrb[0].mxu0 %v66
    %v1387 = vpop.f32.mrb[0].mxu0
    %v1388 = vadd.f32 %v1347, %v1387
    %v1389 = vpop.f32.mrb[0].mxu0
    %v1390 = vadd.f32 %v1349, %v1389
    %v1391 = vpop.f32.mrb[0].mxu0
    %v1392 = vpop.f32.mrb[0].mxu0
    %1393 = vdwg.mxu0
    %1394 = vmatprep.subr.bf16.mxu0 %v1068
    %1395 = vmatpush1.bf16.msra.mxu0 %v1067
    %1396 = vmatprep.subr.bf16.mxu0 0
    %1397 = vmatpush1.bf16.msra.mxu0 0
    %1398 = vmatprep.subr.bf16.mxu0 0
    %1399 = vmatpush1.bf16.msra.mxu0 0
    %1400 = vmatprep.subr.bf16.mxu0 0
    %1401 = vmatpush1.bf16.msra.mxu0 0
    %1402 = vmatprep.subr.bf16.mxu0 0
    %1403 = vmatpush1.bf16.msra.mxu0 0
    %1404 = vmatprep.subr.bf16.mxu0 0
    %1405 = vmatpush1.bf16.msra.mxu0 0
    %1406 = vmatprep.subr.bf16.mxu0 0
    %1407 = vmatpush1.bf16.msra.mxu0 0
    %1408 = vmatprep.subr.bf16.mxu0 0
    %1409 = vmatpush1.bf16.msra.mxu0 0
    %1410 = vmatprep.subr.bf16.mxu0 0
    %1411 = vmatpush1.bf16.msra.mxu0 0
    %1412 = vmatprep.subr.bf16.mxu0 0
    %1413 = vmatpush1.bf16.msra.mxu0 0
    %1414 = vmatprep.subr.bf16.mxu0 0
    %1415 = vmatpush1.bf16.msra.mxu0 0
    %1416 = vmatprep.subr.bf16.mxu0 0
    %1417 = vmatpush1.bf16.msra.mxu0 0
    %1418 = vmatprep.subr.bf16.mxu0 0
    %1419 = vmatpush1.bf16.msra.mxu0 0
    %1420 = vmatprep.subr.bf16.mxu0 0
    %1421 = vmatpush1.bf16.msra.mxu0 0
    %1422 = vmatprep.subr.bf16.mxu0 0
    %1423 = vmatpush1.bf16.msra.mxu0 0
    %1424 = vmatprep.subr.bf16.mxu0 0
    %1425 = vmatpush1.bf16.msra.mxu0 0
    %1426 = vmatprep.mubr.bf16.mxu0 0
    %1427 = vmatmul.mubr.bf16.gmra.mrb[0].mxu0 %v1269
    %v1428 = vpop.f32.mrb[0].mxu0
    %v1429 = vadd.f32 %v1388, %v1428
    %v1430 = vpop.f32.mrb[0].mxu0
    %v1431 = vadd.f32 %v1390, %v1430
    %v1432 = vpop.f32.mrb[0].mxu0
    %v1433 = vpop.f32.mrb[0].mxu0
    %1434 = vdwg.mxu0
    %1435 = vmatprep.subr.bf16.mxu0 %v878
    %1436 = vmatpush1.bf16.msra.mxu0 %v877
    %1437 = vmatprep.subr.bf16.mxu0 %v882
    %1438 = vmatpush1.bf16.msra.mxu0 %v881
    %1439 = vmatprep.subr.bf16.mxu0 %v886
    %1440 = vmatpush1.bf16.msra.mxu0 %v885
    %1441 = vmatprep.subr.bf16.mxu0 %v890
    %1442 = vmatpush1.bf16.msra.mxu0 %v889
    %1443 = vmatprep.subr.bf16.mxu0 %v894
    %1444 = vmatpush1.bf16.msra.mxu0 %v893
    %1445 = vmatprep.subr.bf16.mxu0 %v898
    %1446 = vmatpush1.bf16.msra.mxu0 %v897
    %1447 = vmatprep.subr.bf16.mxu0 %v902
    %1448 = vmatpush1.bf16.msra.mxu0 %v901
    %1449 = vmatprep.subr.bf16.mxu0 %v906
    %1450 = vmatpush1.bf16.msra.mxu0 %v905
    %1451 = vmatprep.subr.bf16.mxu0 %v910
    %1452 = vmatpush1.bf16.msra.mxu0 %v909
    %1453 = vmatprep.subr.bf16.mxu0 %v914
    %1454 = vmatpush1.bf16.msra.mxu0 %v913
    %1455 = vmatprep.subr.bf16.mxu0 %v918
    %1456 = vmatpush1.bf16.msra.mxu0 %v917
    %1457 = vmatprep.subr.bf16.mxu0 %v922
    %1458 = vmatpush1.bf16.msra.mxu0 %v921
    %1459 = vmatprep.subr.bf16.mxu0 %v926
    %1460 = vmatpush1.bf16.msra.mxu0 %v925
    %1461 = vmatprep.subr.bf16.mxu0 %v930
    %1462 = vmatpush1.bf16.msra.mxu0 %v929
    %1463 = vmatprep.subr.bf16.mxu0 %v934
    %1464 = vmatpush1.bf16.msra.mxu0 %v933
    %1465 = vmatprep.subr.bf16.mxu0 %v938
    %1466 = vmatpush1.bf16.msra.mxu0 %v937
    %1467 = vmatprep.mubr.bf16.mxu0 %v63
    %1468 = vmatmul.mubr.bf16.gmra.mrb[0].mxu0 %v62
    %v1469 = vpop.f32.mrb[0].mxu0
    %v1470 = vadd.f32 %v278, %v1469
    %v1471 = vpop.f32.mrb[0].mxu0
    %v1472 = vadd.f32 %v282, %v1471
    %v1473 = vpop.f32.mrb[0].mxu0
    %v1474 = vpop.f32.mrb[0].mxu0
    %1475 = vdwg.mxu0
    %1476 = vmatprep.subr.bf16.mxu0 %v942
    %1477 = vmatpush1.bf16.msra.mxu0 %v941
    %1478 = vmatprep.subr.bf16.mxu0 %v946
    %1479 = vmatpush1.bf16.msra.mxu0 %v945
    %1480 = vmatprep.subr.bf16.mxu0 %v950
    %1481 = vmatpush1.bf16.msra.mxu0 %v949
    %1482 = vmatprep.subr.bf16.mxu0 %v954
    %1483 = vmatpush1.bf16.msra.mxu0 %v953
    %1484 = vmatprep.subr.bf16.mxu0 %v958
    %1485 = vmatpush1.bf16.msra.mxu0 %v957
    %1486 = vmatprep.subr.bf16.mxu0 %v962
    %1487 = vmatpush1.bf16.msra.mxu0 %v961
    %1488 = vmatprep.subr.bf16.mxu0 %v966
    %1489 = vmatpush1.bf16.msra.mxu0 %v965
    %1490 = vmatprep.subr.bf16.mxu0 %v970
    %1491 = vmatpush1.bf16.msra.mxu0 %v969
    %1492 = vmatprep.subr.bf16.mxu0 %v974
    %1493 = vmatpush1.bf16.msra.mxu0 %v973
    %1494 = vmatprep.subr.bf16.mxu0 %v978
    %1495 = vmatpush1.bf16.msra.mxu0 %v977
    %1496 = vmatprep.subr.bf16.mxu0 %v982
    %1497 = vmatpush1.bf16.msra.mxu0 %v981
    %1498 = vmatprep.subr.bf16.mxu0 %v986
    %1499 = vmatpush1.bf16.msra.mxu0 %v985
    %1500 = vmatprep.subr.bf16.mxu0 %v990
    %1501 = vmatpush1.bf16.msra.mxu0 %v989
    %1502 = vmatprep.subr.bf16.mxu0 %v994
    %1503 = vmatpush1.bf16.msra.mxu0 %v993
    %1504 = vmatprep.subr.bf16.mxu0 %v998
    %1505 = vmatpush1.bf16.msra.mxu0 %v997
    %1506 = vmatprep.subr.bf16.mxu0 %v1002
    %1507 = vmatpush1.bf16.msra.mxu0 %v1001
    %1508 = vmatprep.mubr.bf16.mxu0 %v65
    %1509 = vmatmul.mubr.bf16.gmra.mrb[0].mxu0 %v64
    %v1510 = vpop.f32.mrb[0].mxu0
    %v1511 = vadd.f32 %v1470, %v1510
    %v1512 = vpop.f32.mrb[0].mxu0
    %v1513 = vadd.f32 %v1472, %v1512
    %v1514 = vpop.f32.mrb[0].mxu0
    %v1515 = vpop.f32.mrb[0].mxu0
    %1516 = vdwg.mxu0
    %1517 = vmatprep.subr.bf16.mxu0 %v1006
    %1518 = vmatpush1.bf16.msra.mxu0 %v1005
    %1519 = vmatprep.subr.bf16.mxu0 %v1010
    %1520 = vmatpush1.bf16.msra.mxu0 %v1009
    %1521 = vmatprep.subr.bf16.mxu0 %v1014
    %1522 = vmatpush1.bf16.msra.mxu0 %v1013
    %1523 = vmatprep.subr.bf16.mxu0 %v1018
    %1524 = vmatpush1.bf16.msra.mxu0 %v1017
    %1525 = vmatprep.subr.bf16.mxu0 %v1022
    %1526 = vmatpush1.bf16.msra.mxu0 %v1021
    %1527 = vmatprep.subr.bf16.mxu0 %v1026
    %1528 = vmatpush1.bf16.msra.mxu0 %v1025
    %1529 = vmatprep.subr.bf16.mxu0 %v1030
    %1530 = vmatpush1.bf16.msra.mxu0 %v1029
    %1531 = vmatprep.subr.bf16.mxu0 %v1034
    %1532 = vmatpush1.bf16.msra.mxu0 %v1033
    %1533 = vmatprep.subr.bf16.mxu0 %v1038
    %1534 = vmatpush1.bf16.msra.mxu0 %v1037
    %1535 = vmatprep.subr.bf16.mxu0 %v1042
    %1536 = vmatpush1.bf16.msra.mxu0 %v1041
    %1537 = vmatprep.subr.bf16.mxu0 %v1046
    %1538 = vmatpush1.bf16.msra.mxu0 %v1045
    %1539 = vmatprep.subr.bf16.mxu0 %v1050
    %1540 = vmatpush1.bf16.msra.mxu0 %v1049
    %1541 = vmatprep.subr.bf16.mxu0 %v1054
    %1542 = vmatpush1.bf16.msra.mxu0 %v1053
    %1543 = vmatprep.subr.bf16.mxu0 %v1058
    %1544 = vmatpush1.bf16.msra.mxu0 %v1057
    %1545 = vmatprep.subr.bf16.mxu0 %v1062
    %1546 = vmatpush1.bf16.msra.mxu0 %v1061
    %1547 = vmatprep.subr.bf16.mxu0 %v1066
    %1548 = vmatpush1.bf16.msra.mxu0 %v1065
    %1549 = vmatprep.mubr.bf16.mxu0 %v67
    %1550 = vmatmul.mubr.bf16.gmra.mrb[0].mxu0 %v66
    %v1551 = vpop.f32.mrb[0].mxu0
    %v1552 = vadd.f32 %v1511, %v1551
    %v1553 = vpop.f32.mrb[0].mxu0
    %v1554 = vadd.f32 %v1513, %v1553
    %v1555 = vpop.f32.mrb[0].mxu0
    %v1556 = vpop.f32.mrb[0].mxu0
    %1557 = vdwg.mxu0
    %1558 = vmatprep.subr.bf16.mxu0 %v1070
    %1559 = vmatpush1.bf16.msra.mxu0 %v1069
    %1560 = vmatprep.subr.bf16.mxu0 0
    %1561 = vmatpush1.bf16.msra.mxu0 0
    %1562 = vmatprep.subr.bf16.mxu0 0
    %1563 = vmatpush1.bf16.msra.mxu0 0
    %1564 = vmatprep.subr.bf16.mxu0 0
    %1565 = vmatpush1.bf16.msra.mxu0 0
    %1566 = vmatprep.subr.bf16.mxu0 0
    %1567 = vmatpush1.bf16.msra.mxu0 0
    %1568 = vmatprep.subr.bf16.mxu0 0
    %1569 = vmatpush1.bf16.msra.mxu0 0
    %1570 = vmatprep.subr.bf16.mxu0 0
    %1571 = vmatpush1.bf16.msra.mxu0 0
    %1572 = vmatprep.subr.bf16.mxu0 0
    %1573 = vmatpush1.bf16.msra.mxu0 0
    %1574 = vmatprep.subr.bf16.mxu0 0
    %1575 = vmatpush1.bf16.msra.mxu0 0
    %1576 = vmatprep.subr.bf16.mxu0 0
    %1577 = vmatpush1.bf16.msra.mxu0 0
    %1578 = vmatprep.subr.bf16.mxu0 0
    %1579 = vmatpush1.bf16.msra.mxu0 0
    %1580 = vmatprep.subr.bf16.mxu0 0
    %1581 = vmatpush1.bf16.msra.mxu0 0
    %1582 = vmatprep.subr.bf16.mxu0 0
    %1583 = vmatpush1.bf16.msra.mxu0 0
    %1584 = vmatprep.subr.bf16.mxu0 0
    %1585 = vmatpush1.bf16.msra.mxu0 0
    %1586 = vmatprep.subr.bf16.mxu0 0
    %1587 = vmatpush1.bf16.msra.mxu0 0
    %1588 = vmatprep.subr.bf16.mxu0 0
    %1589 = vmatpush1.bf16.msra.mxu0 0
    %1590 = vmatprep.mubr.bf16.mxu0 0
    %1591 = vmatmul.mubr.bf16.gmra.mrb[0].mxu0 %v1269
    %v1592 = vpop.f32.mrb[0].mxu0
    %v1593 = vadd.f32 %v1552, %v1592
    %v1594 = vpop.f32.mrb[0].mxu0
    %v1595 = vadd.f32 %v1554, %v1594
    %v1596 = vpop.f32.mrb[0].mxu0
    %v1597 = vpop.f32.mrb[0].mxu0
    %1598 = vdwg.mxu0
    %v1599 = vmax.f32 %v1429, 0.0
    %v1600 = vmax.f32 %v1431, 0.0
    %v1601 = vmax.f32 %v1593, 0.0
    %v1602 = vmax.f32 %v1595, 0.0
    %v1603 = vpack.c.bf16 %v1599, %v1599
    %v1604 = vpack.c.bf16 %v1600, %v1600
    %v1605 = vpack.c.bf16 %v1601, %v1601
    %v1606 = vpack.c.bf16 %v1602, %v1602
    %v1607 = vld [vmem:[%s4] sm:$0xf]
    %v1608 = vld [vmem:[%s4 + $0x4] sm:$0xf]
    %v1609 = vld [vmem:[%s4 + $0x8] sm:$0xf]
    %v1610 = vld [vmem:[%s4 + $0xc] sm:$0xf]
    %v1611 = vld [vmem:[%s4 + $0x10] sm:$0xf]
    %v1612 = vld [vmem:[%s4 + $0x14] sm:$0xf]
    %v1613 = vld [vmem:[%s4 + $0x18] sm:$0xf]
    %v1614 = vld [vmem:[%s4 + $0x1c] sm:$0xf]
    %v1615 = vld [vmem:[%s4 + $0x20] sm:$0xf]
    %v1616 = vld [vmem:[%s4 + $0x24] sm:$0xf]
    %v1617 = vld [vmem:[%s4 + $0x28] sm:$0xf]
    %v1618 = vld [vmem:[%s4 + $0x2c] sm:$0xf]
    %v1619 = vld [vmem:[%s4 + $0x30] sm:$0xf]
    %v1620 = vld [vmem:[%s4 + $0x34] sm:$0xf]
    %v1621 = vld [vmem:[%s4 + $0x38] sm:$0xf]
    %v1622 = vld [vmem:[%s4 + $0x3c] sm:$0xf]
    %v1623 = vld [vmem:[%s4 + $0x40] sm:$0xf]
    %v1624 = vld [vmem:[%s4 + $0x44] sm:$0xf]
    %v1625 = vld [vmem:[%s4 + $0x48] sm:$0xf]
    %v1626 = vld [vmem:[%s4 + $0x4c] sm:$0xf]
    %v1627 = vld [vmem:[%s4 + $0x50] sm:$0xf]
    %v1628 = vld [vmem:[%s4 + $0x54] sm:$0xf]
    %v1629 = vld [vmem:[%s4 + $0x58] sm:$0xf]
    %v1630 = vld [vmem:[%s4 + $0x5c] sm:$0xf]
    %v1631 = vld [vmem:[%s4 + $0x60] sm:$0xf]
    %v1632 = vld [vmem:[%s4 + $0x64] sm:$0xf]
    %v1633 = vld [vmem:[%s4 + $0x68] sm:$0xf]
    %v1634 = vld [vmem:[%s4 + $0x6c] sm:$0xf]
    %v1635 = vld [vmem:[%s4 + $0x70] sm:$0xf]
    %v1636 = vld [vmem:[%s4 + $0x74] sm:$0xf]
    %v1637 = vld [vmem:[%s4 + $0x78] sm:$0xf]
    %v1638 = vld [vmem:[%s4 + $0x7c] sm:$0xf]
    %v1639 = vld [vmem:[%s4 + $0x80] sm:$0xf]
    %v1640 = vld [vmem:[%s4 + $0x84] sm:$0xf]
    %v1641 = vld [vmem:[%s4 + $0x88] sm:$0xf]
    %v1642 = vld [vmem:[%s4 + $0x8c] sm:$0xf]
    %v1643 = vld [vmem:[%s4 + $0x90] sm:$0xf]
    %v1644 = vld [vmem:[%s4 + $0x94] sm:$0xf]
    %v1645 = vld [vmem:[%s4 + $0x98] sm:$0xf]
    %v1646 = vld [vmem:[%s4 + $0x9c] sm:$0xf]
    %v1647 = vld [vmem:[%s4 + $0xa0] sm:$0xf]
    %v1648 = vld [vmem:[%s4 + $0xa4] sm:$0xf]
    %v1649 = vld [vmem:[%s4 + $0xa8] sm:$0xf]
    %v1650 = vld [vmem:[%s4 + $0xac] sm:$0xf]
    %v1651 = vld [vmem:[%s4 + $0xb0] sm:$0xf]
    %v1652 = vld [vmem:[%s4 + $0xb4] sm:$0xf]
    %v1653 = vld [vmem:[%s4 + $0xb8] sm:$0xf]
    %v1654 = vld [vmem:[%s4 + $0xbc] sm:$0xf]
    %v1655 = vld [vmem:[%s4 + $0xc0] sm:$0xf]
    %v1656 = vld [vmem:[%s4 + $0xc4] sm:$0xf]
    %v1657 = vld [vmem:[%s4 + $0xc8] sm:$0xf]
    %v1658 = vld [vmem:[%s4 + $0xcc] sm:$0xf]
    %v1659 = vld [vmem:[%s4 + $0xd0] sm:$0xf]
    %v1660 = vld [vmem:[%s4 + $0xd4] sm:$0xf]
    %v1661 = vld [vmem:[%s4 + $0xd8] sm:$0xf]
    %v1662 = vld [vmem:[%s4 + $0xdc] sm:$0xf]
    %v1663 = vld [vmem:[%s4 + $0xe0] sm:$0xf]
    %v1664 = vld [vmem:[%s4 + $0xe4] sm:$0xf]
    %v1665 = vld [vmem:[%s4 + $0xe8] sm:$0xf]
    %v1666 = vld [vmem:[%s4 + $0xec] sm:$0xf]
    %v1667 = vld [vmem:[%s4 + $0xf0] sm:$0xf]
    %v1668 = vld [vmem:[%s4 + $0xf4] sm:$0xf]
    %v1669 = vld [vmem:[%s4 + $0xf8] sm:$0xf]
    %v1670 = vld [vmem:[%s4 + $0xfc] sm:$0xf]
    %v1671 = vld [vmem:[%s5] sm:$0x1]
    %v1673 = vlaneseq
    %v1674 = vshrl.u32 %v1673, 7
    %v1675 = vsub.s32 0, %v1674
    %v1676 = vrot.slane %v1671, %v1675
    %v1742 = vunpack.c.l.b16 %v1607
    %v1743 = vunpack.c.l.b16 %v1608
    %v1744 = vunpack.c.l.b16 %v1609
    %v1745 = vunpack.c.l.b16 %v1610
    %v1746 = vunpack.c.l.b16 %v1611
    %v1747 = vunpack.c.l.b16 %v1612
    %v1748 = vunpack.c.l.b16 %v1613
    %v1749 = vunpack.c.l.b16 %v1614
    %v1750 = vunpack.c.l.b16 %v1615
    %v1751 = vunpack.c.l.b16 %v1616
    %v1752 = vunpack.c.l.b16 %v1617
    %v1753 = vunpack.c.l.b16 %v1618
    %v1754 = vunpack.c.l.b16 %v1619
    %v1755 = vunpack.c.l.b16 %v1620
    %v1756 = vunpack.c.l.b16 %v1621
    %v1757 = vunpack.c.l.b16 %v1622
    %v1758 = vunpack.c.l.b16 %v1623
    %v1759 = vunpack.c.l.b16 %v1624
    %v1760 = vunpack.c.l.b16 %v1625
    %v1761 = vunpack.c.l.b16 %v1626
    %v1762 = vunpack.c.l.b16 %v1627
    %v1763 = vunpack.c.l.b16 %v1628
    %v1764 = vunpack.c.l.b16 %v1629
    %v1765 = vunpack.c.l.b16 %v1630
    %v1766 = vunpack.c.l.b16 %v1631
    %v1767 = vunpack.c.l.b16 %v1632
    %v1768 = vunpack.c.l.b16 %v1633
    %v1769 = vunpack.c.l.b16 %v1634
    %v1770 = vunpack.c.l.b16 %v1635
    %v1771 = vunpack.c.l.b16 %v1636
    %v1772 = vunpack.c.l.b16 %v1637
    %v1773 = vunpack.c.l.b16 %v1638
    %v1774 = vunpack.c.l.b16 %v1639
    %v1775 = vunpack.c.l.b16 %v1640
    %v1776 = vunpack.c.l.b16 %v1641
    %v1777 = vunpack.c.l.b16 %v1642
    %v1778 = vunpack.c.l.b16 %v1643
    %v1779 = vunpack.c.l.b16 %v1644
    %v1780 = vunpack.c.l.b16 %v1645
    %v1781 = vunpack.c.l.b16 %v1646
    %v1782 = vunpack.c.l.b16 %v1647
    %v1783 = vunpack.c.l.b16 %v1648
    %v1784 = vunpack.c.l.b16 %v1649
    %v1785 = vunpack.c.l.b16 %v1650
    %v1786 = vunpack.c.l.b16 %v1651
    %v1787 = vunpack.c.l.b16 %v1652
    %v1788 = vunpack.c.l.b16 %v1653
    %v1789 = vunpack.c.l.b16 %v1654
    %v1790 = vunpack.c.l.b16 %v1655
    %v1791 = vunpack.c.l.b16 %v1656
    %v1792 = vunpack.c.l.b16 %v1657
    %v1793 = vunpack.c.l.b16 %v1658
    %v1794 = vunpack.c.l.b16 %v1659
    %v1795 = vunpack.c.l.b16 %v1660
    %v1796 = vunpack.c.l.b16 %v1661
    %v1797 = vunpack.c.l.b16 %v1662
    %v1798 = vunpack.c.l.b16 %v1663
    %v1799 = vunpack.c.l.b16 %v1664
    %v1800 = vunpack.c.l.b16 %v1665
    %v1801 = vunpack.c.l.b16 %v1666
    %v1802 = vunpack.c.l.b16 %v1667
    %v1803 = vunpack.c.l.b16 %v1668
    %v1804 = vunpack.c.l.b16 %v1669
    %v1805 = vunpack.c.l.b16 %v1670
    %v1806 = vpack.c.b16 %v1743, %v1742
    %v1807 = vpack.c.b16 %v1745, %v1744
    %v1808 = vpack.c.b16 %v1747, %v1746
    %v1809 = vpack.c.b16 %v1749, %v1748
    %v1810 = vpack.c.b16 %v1751, %v1750
    %v1811 = vpack.c.b16 %v1753, %v1752
    %v1812 = vpack.c.b16 %v1755, %v1754
    %v1813 = vpack.c.b16 %v1757, %v1756
    %v1814 = vpack.c.b16 %v1759, %v1758
    %v1815 = vpack.c.b16 %v1761, %v1760
    %v1816 = vpack.c.b16 %v1763, %v1762
    %v1817 = vpack.c.b16 %v1765, %v1764
    %v1818 = vpack.c.b16 %v1767, %v1766
    %v1819 = vpack.c.b16 %v1769, %v1768
    %v1820 = vpack.c.b16 %v1771, %v1770
    %v1821 = vpack.c.b16 %v1773, %v1772
    %v1822 = vpack.c.b16 %v1775, %v1774
    %v1823 = vpack.c.b16 %v1777, %v1776
    %v1824 = vpack.c.b16 %v1779, %v1778
    %v1825 = vpack.c.b16 %v1781, %v1780
    %v1826 = vpack.c.b16 %v1783, %v1782
    %v1827 = vpack.c.b16 %v1785, %v1784
    %v1828 = vpack.c.b16 %v1787, %v1786
    %v1829 = vpack.c.b16 %v1789, %v1788
    %v1830 = vpack.c.b16 %v1791, %v1790
    %v1831 = vpack.c.b16 %v1793, %v1792
    %v1832 = vpack.c.b16 %v1795, %v1794
    %v1833 = vpack.c.b16 %v1797, %v1796
    %v1834 = vpack.c.b16 %v1799, %v1798
    %v1835 = vpack.c.b16 %v1801, %v1800
    %v1836 = vpack.c.b16 %v1803, %v1802
    %v1837 = vpack.c.b16 %v1805, %v1804
    %1870 = vmatprep.subr.bf16.mxu0 0
    %1871 = vmatpush1.bf16.msra.mxu0 %v1806
    %1872 = vmatprep.subr.bf16.mxu0 0
    %1873 = vmatpush1.bf16.msra.mxu0 %v1807
    %1874 = vmatprep.subr.bf16.mxu0 0
    %1875 = vmatpush1.bf16.msra.mxu0 %v1808
    %1876 = vmatprep.subr.bf16.mxu0 0
    %1877 = vmatpush1.bf16.msra.mxu0 %v1809
    %1878 = vmatprep.subr.bf16.mxu0 0
    %1879 = vmatpush1.bf16.msra.mxu0 %v1810
    %1880 = vmatprep.subr.bf16.mxu0 0
    %1881 = vmatpush1.bf16.msra.mxu0 %v1811
    %1882 = vmatprep.subr.bf16.mxu0 0
    %1883 = vmatpush1.bf16.msra.mxu0 %v1812
    %1884 = vmatprep.subr.bf16.mxu0 0
    %1885 = vmatpush1.bf16.msra.mxu0 %v1813
    %1886 = vmatprep.subr.bf16.mxu0 0
    %1887 = vmatpush1.bf16.msra.mxu0 %v1814
    %1888 = vmatprep.subr.bf16.mxu0 0
    %1889 = vmatpush1.bf16.msra.mxu0 %v1815
    %1890 = vmatprep.subr.bf16.mxu0 0
    %1891 = vmatpush1.bf16.msra.mxu0 %v1816
    %1892 = vmatprep.subr.bf16.mxu0 0
    %1893 = vmatpush1.bf16.msra.mxu0 %v1817
    %1894 = vmatprep.subr.bf16.mxu0 0
    %1895 = vmatpush1.bf16.msra.mxu0 %v1818
    %1896 = vmatprep.subr.bf16.mxu0 0
    %1897 = vmatpush1.bf16.msra.mxu0 %v1819
    %1898 = vmatprep.subr.bf16.mxu0 0
    %1899 = vmatpush1.bf16.msra.mxu0 %v1820
    %1900 = vmatprep.subr.bf16.mxu0 0
    %1901 = vmatpush1.bf16.msra.mxu0 %v1821
    %1902 = vmatprep.mubr.bf16.mxu0 %v1604
    %1903 = vmatmul.mubr.bf16.gmra.mrb[0].mxu0 %v1603
    %v1904 = vpop.f32.mrb[0].mxu0
    %v1905 = vadd.f32 %v1676, %v1904
    %v1906 = vpop.f32.mrb[0].mxu0
    %v1907 = vpop.f32.mrb[0].mxu0
    %v1908 = vpop.f32.mrb[0].mxu0
    %1909 = vdwg.mxu0
    %1910 = vmatprep.subr.bf16.mxu0 0
    %1911 = vmatpush1.bf16.msra.mxu0 %v1822
    %1912 = vmatprep.subr.bf16.mxu0 0
    %1913 = vmatpush1.bf16.msra.mxu0 %v1823
    %1914 = vmatprep.subr.bf16.mxu0 0
    %1915 = vmatpush1.bf16.msra.mxu0 %v1824
    %1916 = vmatprep.subr.bf16.mxu0 0
    %1917 = vmatpush1.bf16.msra.mxu0 %v1825
    %1918 = vmatprep.subr.bf16.mxu0 0
    %1919 = vmatpush1.bf16.msra.mxu0 %v1826
    %1920 = vmatprep.subr.bf16.mxu0 0
    %1921 = vmatpush1.bf16.msra.mxu0 %v1827
    %1922 = vmatprep.subr.bf16.mxu0 0
    %1923 = vmatpush1.bf16.msra.mxu0 %v1828
    %1924 = vmatprep.subr.bf16.mxu0 0
    %1925 = vmatpush1.bf16.msra.mxu0 %v1829
    %1926 = vmatprep.subr.bf16.mxu0 0
    %1927 = vmatpush1.bf16.msra.mxu0 %v1830
    %1928 = vmatprep.subr.bf16.mxu0 0
    %1929 = vmatpush1.bf16.msra.mxu0 %v1831
    %1930 = vmatprep.subr.bf16.mxu0 0
    %1931 = vmatpush1.bf16.msra.mxu0 %v1832
    %1932 = vmatprep.subr.bf16.mxu0 0
    %1933 = vmatpush1.bf16.msra.mxu0 %v1833
    %1934 = vmatprep.subr.bf16.mxu0 0
    %1935 = vmatpush1.bf16.msra.mxu0 %v1834
    %1936 = vmatprep.subr.bf16.mxu0 0
    %1937 = vmatpush1.bf16.msra.mxu0 %v1835
    %1938 = vmatprep.subr.bf16.mxu0 0
    %1939 = vmatpush1.bf16.msra.mxu0 %v1836
    %1940 = vmatprep.subr.bf16.mxu0 0
    %1941 = vmatpush1.bf16.msra.mxu0 %v1837
    %1942 = vmatprep.mubr.bf16.mxu0 %v1606
    %1943 = vmatmul.mubr.bf16.gmra.mrb[0].mxu0 %v1605
    %v1944 = vpop.f32.mrb[0].mxu0
    %v1945 = vadd.f32 %v1905, %v1944
    %v1946 = vpop.f32.mrb[0].mxu0
    %v1947 = vpop.f32.mrb[0].mxu0
    %v1948 = vpop.f32.mrb[0].mxu0
    %1949 = vdwg.mxu0
    %1950 = vst [vmem:[%s12] sm:$0xff] %v1945
    %v1951 = vld [vmem:[%s1] sm:$0xff]
    %v1952 = vmul.f32 %v1945, 0.5
    %v1953 = vmul.f32 %v1952, 1.442695
    %v1954 = vpow.pop %v1953
    %1956 = vrot.lane.b32.xlu0 %v1954, 108
    %v1957 = vpop.permute.xlu0 %1956
    %v1959 = vmul.f32 %v1951, %v1957
    %v1960 = vadd.f32 %v1945, %v1959
    %1962 = vrot.lane.b32.xlu0 %v1951, 20
    %v1963 = vpop.permute.xlu0 %1962
    %v1965 = vadd.f32 %v1945, %v1963
    %vm1966 = vcmask 408896
    %v1967 = vsel %vm1966, %v1965, -inf
    %1968 = vmax.xlane.f32.xlu0 %v1967
    %v1969 = vpop.xlane.xlu0 %1968
    %v1970 = vsub.f32 %v1965, %v1969
    %v1971 = vmul.f32 %v1970, 1.442695
    %v1972 = vpow.pop %v1971
    %1974 = vrot.lane.b32.xlu0 %v1972, 88
    %v1975 = vpop.permute.xlu0 %1974
    %vm1977 = vcmask 80896
    %v1978 = vsel %vm1977, %v1975, 0.0
    %1979 = vadd.xlane.f32.xlu0 %v1978
    %v1980 = vpop.xlane.xlu0 %1979
    %v1981 = vrcp.pop %v1980
    %v1982 = vmul.f32 %v1972, %v1981
    %v1983 = vpack.c.bf16 %v1960, %v1960
    %v1984 = vld [vmem:[%s6] sm:$0xf]
    %v1985 = vld [vmem:[%s6 + $0x4] sm:$0xf]
    %v1986 = vld [vmem:[%s6 + $0x8] sm:$0x3]
    %v1987 = vpack.c.bf16 %v1982, %v1982
    %v1988 = vld [vmem:[%s7] sm:$0xf]
    %v1989 = vld [vmem:[%s7 + $0x4] sm:$0x1]
    %1991 = vrot.lane.b32.xlu0 %v1987, 88
    %v1992 = vpop.permute.xlu0 %1991
    %v1995 = vunpack.c.l.b16 %v1988
    %v1996 = vunpack.c.l.b16 %v1989
    %v1997 = vpack.c.b16 %v1996, %v1995
    %v1999 = vsel %vm1977, %v1992, 0
    %vm2001 = vcmask 1044480
    %v2003 = vsel %vm2001, %v1997, 0
    %2005 = vmatprep.subr.bf16.mxu0 0
    %2006 = vmatpush1.bf16.msra.mxu0 %v2003
    %2007 = vmatprep.subr.bf16.mxu0 0
    %2008 = vmatpush1.bf16.msra.mxu0 0
    %2009 = vmatprep.subr.bf16.mxu0 0
    %2010 = vmatpush1.bf16.msra.mxu0 0
    %2011 = vmatprep.subr.bf16.mxu0 0
    %2012 = vmatpush1.bf16.msra.mxu0 0
    %2013 = vmatprep.subr.bf16.mxu0 0
    %2014 = vmatpush1.bf16.msra.mxu0 0
    %2015 = vmatprep.subr.bf16.mxu0 0
    %2016 = vmatpush1.bf16.msra.mxu0 0
    %2017 = vmatprep.subr.bf16.mxu0 0
    %2018 = vmatpush1.bf16.msra.mxu0 0
    %2019 = vmatprep.subr.bf16.mxu0 0
    %2020 = vmatpush1.bf16.msra.mxu0 0
    %2021 = vmatprep.subr.bf16.mxu0 0
    %2022 = vmatpush1.bf16.msra.mxu0 0
    %2023 = vmatprep.subr.bf16.mxu0 0
    %2024 = vmatpush1.bf16.msra.mxu0 0
    %2025 = vmatprep.subr.bf16.mxu0 0
    %2026 = vmatpush1.bf16.msra.mxu0 0
    %2027 = vmatprep.subr.bf16.mxu0 0
    %2028 = vmatpush1.bf16.msra.mxu0 0
    %2029 = vmatprep.subr.bf16.mxu0 0
    %2030 = vmatpush1.bf16.msra.mxu0 0
    %2031 = vmatprep.subr.bf16.mxu0 0
    %2032 = vmatpush1.bf16.msra.mxu0 0
    %2033 = vmatprep.subr.bf16.mxu0 0
    %2034 = vmatpush1.bf16.msra.mxu0 0
    %2035 = vmatprep.subr.bf16.mxu0 0
    %2036 = vmatpush1.bf16.msra.mxu0 0
    %2037 = vmatprep.mubr.bf16.mxu0 0
    %2038 = vmatmul.mubr.bf16.gmra.mrb[0].mxu0 %v1999
    %v2039 = vpop.f32.mrb[0].mxu0
    %v2040 = vadd.f32 0.0, %v2039
    %v2041 = vpop.f32.mrb[0].mxu0
    %v2042 = vpop.f32.mrb[0].mxu0
    %v2043 = vpop.f32.mrb[0].mxu0
    %2044 = vdwg.mxu0
    %v2048 = vunpack.c.l.b16 %v1984
    %v2049 = vunpack.c.l.b16 %v1985
    %v2050 = vunpack.c.l.b16 %v1986
    %v2051 = vpack.c.b16 %v2049, %v2048
    %v2052 = vpack.c.b16 %v2050, %v2050
    %vm2054 = vcmask 162816
    %v2056 = vsel %vm2054, %v1983, 0
    %vm2058 = vcmask 1041408
    %v2060 = vsel %vm2058, %v2052, 0
    %2062 = vmatprep.subr.bf16.mxu0 0
    %2063 = vmatpush1.bf16.msra.mxu0 %v2051
    %2064 = vmatprep.subr.bf16.mxu0 0
    %2065 = vmatpush1.bf16.msra.mxu0 %v2060
    %2066 = vmatprep.subr.bf16.mxu0 0
    %2067 = vmatpush1.bf16.msra.mxu0 0
    %2068 = vmatprep.subr.bf16.mxu0 0
    %2069 = vmatpush1.bf16.msra.mxu0 0
    %2070 = vmatprep.subr.bf16.mxu0 0
    %2071 = vmatpush1.bf16.msra.mxu0 0
    %2072 = vmatprep.subr.bf16.mxu0 0
    %2073 = vmatpush1.bf16.msra.mxu0 0
    %2074 = vmatprep.subr.bf16.mxu0 0
    %2075 = vmatpush1.bf16.msra.mxu0 0
    %2076 = vmatprep.subr.bf16.mxu0 0
    %2077 = vmatpush1.bf16.msra.mxu0 0
    %2078 = vmatprep.subr.bf16.mxu0 0
    %2079 = vmatpush1.bf16.msra.mxu0 0
    %2080 = vmatprep.subr.bf16.mxu0 0
    %2081 = vmatpush1.bf16.msra.mxu0 0
    %2082 = vmatprep.subr.bf16.mxu0 0
    %2083 = vmatpush1.bf16.msra.mxu0 0
    %2084 = vmatprep.subr.bf16.mxu0 0
    %2085 = vmatpush1.bf16.msra.mxu0 0
    %2086 = vmatprep.subr.bf16.mxu0 0
    %2087 = vmatpush1.bf16.msra.mxu0 0
    %2088 = vmatprep.subr.bf16.mxu0 0
    %2089 = vmatpush1.bf16.msra.mxu0 0
    %2090 = vmatprep.subr.bf16.mxu0 0
    %2091 = vmatpush1.bf16.msra.mxu0 0
    %2092 = vmatprep.subr.bf16.mxu0 0
    %2093 = vmatpush1.bf16.msra.mxu0 0
    %2094 = vmatprep.mubr.bf16.mxu0 0
    %2095 = vmatmul.mubr.bf16.gmra.mrb[0].mxu0 %v2056
    %v2096 = vpop.f32.mrb[0].mxu0
    %v2097 = vadd.f32 %v2040, %v2096
    %v2098 = vpop.f32.mrb[0].mxu0
    %v2099 = vpop.f32.mrb[0].mxu0
    %v2100 = vpop.f32.mrb[0].mxu0
    %2101 = vdwg.mxu0
    %v2102 = vld [vmem:[%s8] sm:$0x1]
    %v2104 = vlaneseq
    %v2105 = vshrl.u32 %v2104, 7
    %v2106 = vsub.s32 0, %v2105
    %v2107 = vrot.slane %v2102, %v2106
    %v2109 = vadd.f32 %v2097, %v2107
    %v2110 = vmax.f32 %v2109, 0.0
    %v2111 = vpack.c.bf16 %v2110, %v2110
    %v2112 = vld [vmem:[%s9] sm:$0xff]
    %v2113 = vld [vmem:[%s9 + $0x8] sm:$0xff]
    %v2114 = vld [vmem:[%s9 + $0x10] sm:$0xff]
    %v2115 = vld [vmem:[%s9 + $0x18] sm:$0xf]
    %v2116 = vld [vmem:[%s9 + $0x1c] sm:$0xff]
    %v2117 = vld [vmem:[%s9 + $0x24] sm:$0xff]
    %v2118 = vld [vmem:[%s9 + $0x2c] sm:$0xff]
    %v2119 = vld [vmem:[%s9 + $0x34] sm:$0xf]
    %v2120 = vld [vmem:[%s9 + $0x38] sm:$0xff]
    %v2121 = vld [vmem:[%s9 + $0x40] sm:$0xff]
    %v2122 = vld [vmem:[%s9 + $0x48] sm:$0xff]
    %v2123 = vld [vmem:[%s9 + $0x50] sm:$0xf]
    %v2124 = vld [vmem:[%s9 + $0x54] sm:$0xff]
    %v2125 = vld [vmem:[%s9 + $0x5c] sm:$0xff]
    %v2126 = vld [vmem:[%s9 + $0x64] sm:$0xff]
    %v2127 = vld [vmem:[%s9 + $0x6c] sm:$0xf]
    %v2128 = vld [vmem:[%s9 + $0x70] sm:$0xff]
    %v2129 = vld [vmem:[%s9 + $0x78] sm:$0xff]
    %v2130 = vld [vmem:[%s9 + $0x80] sm:$0xff]
    %v2131 = vld [vmem:[%s9 + $0x88] sm:$0xf]
    %v2132 = vld [vmem:[%s9 + $0x8c] sm:$0xff]
    %v2133 = vld [vmem:[%s9 + $0x94] sm:$0xff]
    %v2134 = vld [vmem:[%s9 + $0x9c] sm:$0xff]
    %v2135 = vld [vmem:[%s9 + $0xa4] sm:$0xf]
    %v2136 = vld [vmem:[%s9 + $0xa8] sm:$0xff]
    %v2137 = vld [vmem:[%s9 + $0xb0] sm:$0xff]
    %v2138 = vld [vmem:[%s9 + $0xb8] sm:$0xff]
    %v2139 = vld [vmem:[%s9 + $0xc0] sm:$0xf]
    %v2140 = vld [vmem:[%s9 + $0xc4] sm:$0xff]
    %v2141 = vld [vmem:[%s9 + $0xcc] sm:$0xff]
    %v2142 = vld [vmem:[%s9 + $0xd4] sm:$0xff]
    %v2143 = vld [vmem:[%s9 + $0xdc] sm:$0xf]
    %v2144 = vld [vmem:[%s10] sm:$0xff]
    %v2146 = vlaneseq
    %v2147 = vshrl.u32 %v2146, 7
    %v2148 = vsub.s32 0, %v2147
    %v2149 = vrot.slane %v2144, %v2148
    %v2150 = vlaneseq
    %v2151 = vshrl.u32 %v2150, 7
    %v2152 = vsub.s32 1, %v2151
    %v2153 = vrot.slane %v2144, %v2152
    %v2154 = vlaneseq
    %v2155 = vshrl.u32 %v2154, 7
    %v2156 = vsub.s32 2, %v2155
    %v2157 = vrot.slane %v2144, %v2156
    %v2158 = vlaneseq
    %v2159 = vshrl.u32 %v2158, 7
    %v2160 = vsub.s32 3, %v2159
    %v2161 = vrot.slane %v2144, %v2160
    %v2162 = vlaneseq
    %v2163 = vshrl.u32 %v2162, 7
    %v2164 = vsub.s32 4, %v2163
    %v2165 = vrot.slane %v2144, %v2164
    %v2166 = vlaneseq
    %v2167 = vshrl.u32 %v2166, 7
    %v2168 = vsub.s32 5, %v2167
    %v2169 = vrot.slane %v2144, %v2168
    %v2170 = vlaneseq
    %v2171 = vshrl.u32 %v2170, 7
    %v2172 = vsub.s32 6, %v2171
    %v2173 = vrot.slane %v2144, %v2172
    %v2213 = vunpack.c.l.b16 %v2112
    %v2214 = vunpack.c.h.b16 %v2112
    %v2215 = vunpack.c.l.b16 %v2113
    %v2216 = vunpack.c.h.b16 %v2113
    %v2217 = vunpack.c.l.b16 %v2114
    %v2218 = vunpack.c.h.b16 %v2114
    %v2219 = vunpack.c.l.b16 %v2115
    %v2220 = vunpack.c.l.b16 %v2116
    %v2221 = vunpack.c.h.b16 %v2116
    %v2222 = vunpack.c.l.b16 %v2117
    %v2223 = vunpack.c.h.b16 %v2117
    %v2224 = vunpack.c.l.b16 %v2118
    %v2225 = vunpack.c.h.b16 %v2118
    %v2226 = vunpack.c.l.b16 %v2119
    %v2227 = vunpack.c.l.b16 %v2120
    %v2228 = vunpack.c.h.b16 %v2120
    %v2229 = vunpack.c.l.b16 %v2121
    %v2230 = vunpack.c.h.b16 %v2121
    %v2231 = vunpack.c.l.b16 %v2122
    %v2232 = vunpack.c.h.b16 %v2122
    %v2233 = vunpack.c.l.b16 %v2123
    %v2234 = vunpack.c.l.b16 %v2124
    %v2235 = vunpack.c.h.b16 %v2124
    %v2236 = vunpack.c.l.b16 %v2125
    %v2237 = vunpack.c.h.b16 %v2125
    %v2238 = vunpack.c.l.b16 %v2126
    %v2239 = vunpack.c.h.b16 %v2126
    %v2240 = vunpack.c.l.b16 %v2127
    %v2241 = vunpack.c.l.b16 %v2128
    %v2242 = vunpack.c.h.b16 %v2128
    %v2243 = vunpack.c.l.b16 %v2129
    %v2244 = vunpack.c.h.b16 %v2129
    %v2245 = vunpack.c.l.b16 %v2130
    %v2246 = vunpack.c.h.b16 %v2130
    %v2247 = vunpack.c.l.b16 %v2131
    %v2248 = vunpack.c.l.b16 %v2132
    %v2249 = vunpack.c.h.b16 %v2132
    %v2250 = vunpack.c.l.b16 %v2133
    %v2251 = vunpack.c.h.b16 %v2133
    %v2252 = vunpack.c.l.b16 %v2134
    %v2253 = vunpack.c.h.b16 %v2134
    %v2254 = vunpack.c.l.b16 %v2135
    %v2255 = vunpack.c.l.b16 %v2136
    %v2256 = vunpack.c.h.b16 %v2136
    %v2257 = vunpack.c.l.b16 %v2137
    %v2258 = vunpack.c.h.b16 %v2137
    %v2259 = vunpack.c.l.b16 %v2138
    %v2260 = vunpack.c.h.b16 %v2138
    %v2261 = vunpack.c.l.b16 %v2139
    %v2262 = vunpack.c.l.b16 %v2140
    %v2263 = vunpack.c.h.b16 %v2140
    %v2264 = vunpack.c.l.b16 %v2141
    %v2265 = vunpack.c.h.b16 %v2141
    %v2266 = vunpack.c.l.b16 %v2142
    %v2267 = vunpack.c.h.b16 %v2142
    %v2268 = vunpack.c.l.b16 %v2143
    %v2269 = vpack.c.b16 %v2220, %v2213
    %v2270 = vpack.c.b16 %v2221, %v2214
    %v2271 = vpack.c.b16 %v2222, %v2215
    %v2272 = vpack.c.b16 %v2223, %v2216
    %v2273 = vpack.c.b16 %v2224, %v2217
    %v2274 = vpack.c.b16 %v2225, %v2218
    %v2275 = vpack.c.b16 %v2226, %v2219
    %v2276 = vpack.c.b16 %v2234, %v2227
    %v2277 = vpack.c.b16 %v2235, %v2228
    %v2278 = vpack.c.b16 %v2236, %v2229
    %v2279 = vpack.c.b16 %v2237, %v2230
    %v2280 = vpack.c.b16 %v2238, %v2231
    %v2281 = vpack.c.b16 %v2239, %v2232
    %v2282 = vpack.c.b16 %v2240, %v2233
    %v2283 = vpack.c.b16 %v2248, %v2241
    %v2284 = vpack.c.b16 %v2249, %v2242
    %v2285 = vpack.c.b16 %v2250, %v2243
    %v2286 = vpack.c.b16 %v2251, %v2244
    %v2287 = vpack.c.b16 %v2252, %v2245
    %v2288 = vpack.c.b16 %v2253, %v2246
    %v2289 = vpack.c.b16 %v2254, %v2247
    %v2290 = vpack.c.b16 %v2262, %v2255
    %v2291 = vpack.c.b16 %v2263, %v2256
    %v2292 = vpack.c.b16 %v2264, %v2257
    %v2293 = vpack.c.b16 %v2265, %v2258
    %v2294 = vpack.c.b16 %v2266, %v2259
    %v2295 = vpack.c.b16 %v2267, %v2260
    %v2296 = vpack.c.b16 %v2268, %v2261
    %vm2325 = vcmask 523264
    %v2327 = vsel %vm2325, %v2111, 0
    %2329 = vmatprep.subr.bf16.mxu0 %v2270
    %2330 = vmatpush1.bf16.msra.mxu0 %v2269
    %2331 = vmatprep.subr.bf16.mxu0 %v2277
    %2332 = vmatpush1.bf16.msra.mxu0 %v2276
    %2333 = vmatprep.subr.bf16.mxu0 %v2284
    %2334 = vmatpush1.bf16.msra.mxu0 %v2283
    %2335 = vmatprep.subr.bf16.mxu0 %v2291
    %2336 = vmatpush1.bf16.msra.mxu0 %v2290
    %2337 = vmatprep.subr.bf16.mxu0 0
    %2338 = vmatpush1.bf16.msra.mxu0 0
    %2339 = vmatprep.subr.bf16.mxu0 0
    %2340 = vmatpush1.bf16.msra.mxu0 0
    %2341 = vmatprep.subr.bf16.mxu0 0
    %2342 = vmatpush1.bf16.msra.mxu0 0
    %2343 = vmatprep.subr.bf16.mxu0 0
    %2344 = vmatpush1.bf16.msra.mxu0 0
    %2345 = vmatprep.subr.bf16.mxu0 0
    %2346 = vmatpush1.bf16.msra.mxu0 0
    %2347 = vmatprep.subr.bf16.mxu0 0
    %2348 = vmatpush1.bf16.msra.mxu0 0
    %2349 = vmatprep.subr.bf16.mxu0 0
    %2350 = vmatpush1.bf16.msra.mxu0 0
    %2351 = vmatprep.subr.bf16.mxu0 0
    %2352 = vmatpush1.bf16.msra.mxu0 0
    %2353 = vmatprep.subr.bf16.mxu0 0
    %2354 = vmatpush1.bf16.msra.mxu0 0
    %2355 = vmatprep.subr.bf16.mxu0 0
    %2356 = vmatpush1.bf16.msra.mxu0 0
    %2357 = vmatprep.subr.bf16.mxu0 0
    %2358 = vmatpush1.bf16.msra.mxu0 0
    %2359 = vmatprep.subr.bf16.mxu0 0
    %2360 = vmatpush1.bf16.msra.mxu0 0
    %2361 = vmatprep.mubr.bf16.mxu0 0
    %2362 = vmatmul.mubr.bf16.gmra.mrb[0].mxu0 %v2327
    %v2363 = vpop.f32.mrb[0].mxu0
    %v2364 = vadd.f32 %v2149, %v2363
    %v2365 = vpop.f32.mrb[0].mxu0
    %v2366 = vadd.f32 %v2153, %v2365
    %v2367 = vpop.f32.mrb[0].mxu0
    %v2368 = vpop.f32.mrb[0].mxu0
    %2369 = vdwg.mxu0
    %2370 = vmatprep.subr.bf16.mxu0 %v2272
    %2371 = vmatpush1.bf16.msra.mxu0 %v2271
    %2372 = vmatprep.subr.bf16.mxu0 %v2279
    %2373 = vmatpush1.bf16.msra.mxu0 %v2278
    %2374 = vmatprep.subr.bf16.mxu0 %v2286
    %2375 = vmatpush1.bf16.msra.mxu0 %v2285
    %2376 = vmatprep.subr.bf16.mxu0 %v2293
    %2377 = vmatpush1.bf16.msra.mxu0 %v2292
    %2378 = vmatprep.subr.bf16.mxu0 0
    %2379 = vmatpush1.bf16.msra.mxu0 0
    %2380 = vmatprep.subr.bf16.mxu0 0
    %2381 = vmatpush1.bf16.msra.mxu0 0
    %2382 = vmatprep.subr.bf16.mxu0 0
    %2383 = vmatpush1.bf16.msra.mxu0 0
    %2384 = vmatprep.subr.bf16.mxu0 0
    %2385 = vmatpush1.bf16.msra.mxu0 0
    %2386 = vmatprep.subr.bf16.mxu0 0
    %2387 = vmatpush1.bf16.msra.mxu0 0
    %2388 = vmatprep.subr.bf16.mxu0 0
    %2389 = vmatpush1.bf16.msra.mxu0 0
    %2390 = vmatprep.subr.bf16.mxu0 0
    %2391 = vmatpush1.bf16.msra.mxu0 0
    %2392 = vmatprep.subr.bf16.mxu0 0
    %2393 = vmatpush1.bf16.msra.mxu0 0
    %2394 = vmatprep.subr.bf16.mxu0 0
    %2395 = vmatpush1.bf16.msra.mxu0 0
    %2396 = vmatprep.subr.bf16.mxu0 0
    %2397 = vmatpush1.bf16.msra.mxu0 0
    %2398 = vmatprep.subr.bf16.mxu0 0
    %2399 = vmatpush1.bf16.msra.mxu0 0
    %2400 = vmatprep.subr.bf16.mxu0 0
    %2401 = vmatpush1.bf16.msra.mxu0 0
    %2402 = vmatprep.mubr.bf16.mxu0 0
    %2403 = vmatmul.mubr.bf16.gmra.mrb[0].mxu0 %v2327
    %v2404 = vpop.f32.mrb[0].mxu0
    %v2405 = vadd.f32 %v2157, %v2404
    %v2406 = vpop.f32.mrb[0].mxu0
    %v2407 = vadd.f32 %v2161, %v2406
    %v2408 = vpop.f32.mrb[0].mxu0
    %v2409 = vpop.f32.mrb[0].mxu0
    %2410 = vdwg.mxu0
    %2411 = vmatprep.subr.bf16.mxu0 %v2274
    %2412 = vmatpush1.bf16.msra.mxu0 %v2273
    %2413 = vmatprep.subr.bf16.mxu0 %v2281
    %2414 = vmatpush1.bf16.msra.mxu0 %v2280
    %2415 = vmatprep.subr.bf16.mxu0 %v2288
    %2416 = vmatpush1.bf16.msra.mxu0 %v2287
    %2417 = vmatprep.subr.bf16.mxu0 %v2295
    %2418 = vmatpush1.bf16.msra.mxu0 %v2294
    %2419 = vmatprep.subr.bf16.mxu0 0
    %2420 = vmatpush1.bf16.msra.mxu0 0
    %2421 = vmatprep.subr.bf16.mxu0 0
    %2422 = vmatpush1.bf16.msra.mxu0 0
    %2423 = vmatprep.subr.bf16.mxu0 0
    %2424 = vmatpush1.bf16.msra.mxu0 0
    %2425 = vmatprep.subr.bf16.mxu0 0
    %2426 = vmatpush1.bf16.msra.mxu0 0
    %2427 = vmatprep.subr.bf16.mxu0 0
    %2428 = vmatpush1.bf16.msra.mxu0 0
    %2429 = vmatprep.subr.bf16.mxu0 0
    %2430 = vmatpush1.bf16.msra.mxu0 0
    %2431 = vmatprep.subr.bf16.mxu0 0
    %2432 = vmatpush1.bf16.msra.mxu0 0
    %2433 = vmatprep.subr.bf16.mxu0 0
    %2434 = vmatpush1.bf16.msra.mxu0 0
    %2435 = vmatprep.subr.bf16.mxu0 0
    %2436 = vmatpush1.bf16.msra.mxu0 0
    %2437 = vmatprep.subr.bf16.mxu0 0
    %2438 = vmatpush1.bf16.msra.mxu0 0
    %2439 = vmatprep.subr.bf16.mxu0 0
    %2440 = vmatpush1.bf16.msra.mxu0 0
    %2441 = vmatprep.subr.bf16.mxu0 0
    %2442 = vmatpush1.bf16.msra.mxu0 0
    %2443 = vmatprep.mubr.bf16.mxu0 0
    %2444 = vmatmul.mubr.bf16.gmra.mrb[0].mxu0 %v2327
    %v2445 = vpop.f32.mrb[0].mxu0
    %v2446 = vadd.f32 %v2165, %v2445
    %v2447 = vpop.f32.mrb[0].mxu0
    %v2448 = vadd.f32 %v2169, %v2447
    %v2449 = vpop.f32.mrb[0].mxu0
    %v2450 = vpop.f32.mrb[0].mxu0
    %2451 = vdwg.mxu0
    %2452 = vmatprep.subr.bf16.mxu0 0
    %2453 = vmatpush1.bf16.msra.mxu0 %v2275
    %2454 = vmatprep.subr.bf16.mxu0 0
    %2455 = vmatpush1.bf16.msra.mxu0 %v2282
    %2456 = vmatprep.subr.bf16.mxu0 0
    %2457 = vmatpush1.bf16.msra.mxu0 %v2289
    %2458 = vmatprep.subr.bf16.mxu0 0
    %2459 = vmatpush1.bf16.msra.mxu0 %v2296
    %2460 = vmatprep.subr.bf16.mxu0 0
    %2461 = vmatpush1.bf16.msra.mxu0 0
    %2462 = vmatprep.subr.bf16.mxu0 0
    %2463 = vmatpush1.bf16.msra.mxu0 0
    %2464 = vmatprep.subr.bf16.mxu0 0
    %2465 = vmatpush1.bf16.msra.mxu0 0
    %2466 = vmatprep.subr.bf16.mxu0 0
    %2467 = vmatpush1.bf16.msra.mxu0 0
    %2468 = vmatprep.subr.bf16.mxu0 0
    %2469 = vmatpush1.bf16.msra.mxu0 0
    %2470 = vmatprep.subr.bf16.mxu0 0
    %2471 = vmatpush1.bf16.msra.mxu0 0
    %2472 = vmatprep.subr.bf16.mxu0 0
    %2473 = vmatpush1.bf16.msra.mxu0 0
    %2474 = vmatprep.subr.bf16.mxu0 0
    %2475 = vmatpush1.bf16.msra.mxu0 0
    %2476 = vmatprep.subr.bf16.mxu0 0
    %2477 = vmatpush1.bf16.msra.mxu0 0
    %2478 = vmatprep.subr.bf16.mxu0 0
    %2479 = vmatpush1.bf16.msra.mxu0 0
    %2480 = vmatprep.subr.bf16.mxu0 0
    %2481 = vmatpush1.bf16.msra.mxu0 0
    %2482 = vmatprep.subr.bf16.mxu0 0
    %2483 = vmatpush1.bf16.msra.mxu0 0
    %2484 = vmatprep.mubr.bf16.mxu0 0
    %2485 = vmatmul.mubr.bf16.gmra.mrb[0].mxu0 %v2327
    %v2486 = vpop.f32.mrb[0].mxu0
    %v2487 = vadd.f32 %v2173, %v2486
    %v2488 = vpop.f32.mrb[0].mxu0
    %v2489 = vpop.f32.mrb[0].mxu0
    %v2490 = vpop.f32.mrb[0].mxu0
    %2491 = vdwg.mxu0
    %v2492 = vsub.f32 0.0, %v2364
    %v2493 = vsub.f32 0.0, %v2366
    %v2494 = vsub.f32 0.0, %v2405
    %v2495 = vsub.f32 0.0, %v2407
    %v2496 = vsub.f32 0.0, %v2446
    %v2497 = vsub.f32 0.0, %v2448
    %v2498 = vsub.f32 0.0, %v2487
    %v2499 = vmul.f32 %v2492, 1.442695
    %v2500 = vpow.pop %v2499
    %v2501 = vmul.f32 %v2493, 1.442695
    %v2502 = vpow.pop %v2501
    %v2503 = vmul.f32 %v2494, 1.442695
    %v2504 = vpow.pop %v2503
    %v2505 = vmul.f32 %v2495, 1.442695
    %v2506 = vpow.pop %v2505
    %v2507 = vmul.f32 %v2496, 1.442695
    %v2508 = vpow.pop %v2507
    %v2509 = vmul.f32 %v2497, 1.442695
    %v2510 = vpow.pop %v2509
    %v2511 = vmul.f32 %v2498, 1.442695
    %v2512 = vpow.pop %v2511
    %v2513 = vadd.f32 %v2500, 1.0
    %v2514 = vadd.f32 %v2502, 1.0
    %v2515 = vadd.f32 %v2504, 1.0
    %v2516 = vadd.f32 %v2506, 1.0
    %v2517 = vadd.f32 %v2508, 1.0
    %v2518 = vadd.f32 %v2510, 1.0
    %v2519 = vadd.f32 %v2512, 1.0
    %v2520 = vrcp.pop %v2513
    %v2521 = vrcp.pop %v2514
    %v2522 = vrcp.pop %v2515
    %v2523 = vrcp.pop %v2516
    %v2524 = vrcp.pop %v2517
    %v2525 = vrcp.pop %v2518
    %v2526 = vrcp.pop %v2519
    %v2527 = vpack.c.bf16 %v2520, %v2520
    %v2528 = vpack.c.bf16 %v2521, %v2521
    %v2529 = vpack.c.bf16 %v2522, %v2522
    %v2530 = vpack.c.bf16 %v2523, %v2523
    %v2531 = vpack.c.bf16 %v2524, %v2524
    %v2532 = vpack.c.bf16 %v2525, %v2525
    %v2533 = vpack.c.bf16 %v2526, %v2526
    %v2541 = vunpack.c.l.b16 %v2527
    %v2542 = vunpack.c.l.b16 %v2528
    %v2543 = vunpack.c.l.b16 %v2529
    %v2544 = vunpack.c.l.b16 %v2530
    %v2545 = vunpack.c.l.b16 %v2531
    %v2546 = vunpack.c.l.b16 %v2532
    %v2547 = vunpack.c.l.b16 %v2533
    %v2548 = vpack.c.b16 %v2542, %v2541
    %v2549 = vpack.c.b16 %v2544, %v2543
    %v2550 = vpack.c.b16 %v2546, %v2545
    %v2551 = vpack.c.b16 %v2547, %v2547
    %2556 = vst [vmem:[%s11] sm:$0xff] %v2548
    %2557 = vst [vmem:[%s11 + $0x8] sm:$0xff] %v2549
    %2558 = vst [vmem:[%s11 + $0x10] sm:$0xff] %v2550
    %2559 = vst [vmem:[%s11 + $0x18] sm:$0xf] %v2551
    // Predicated region
    $region50: #{vae_gumbel_forward.1} parent=1 // pred_check
      _
    $region51: #{vae_gumbel_forward.1} parent=1 // pred_check_branch
      %2561 = sbr.rel (0) target = $region53
    $region52: #{vae_gumbel_forward.1} parent=1 // pred_region
      _
    $region53: #{vae_gumbel_forward.1} parent=1 // pred_fallthru
      _
    // Predicated region
    $region54: #{vae_gumbel_forward.1} parent=1 // pred_check
      _
    $region55: #{vae_gumbel_forward.1} parent=1 // pred_check_branch
      %2563 = sbr.rel (0) target = $region57
    $region56: #{vae_gumbel_forward.1} parent=1 // pred_region
      _
    $region57: #{vae_gumbel_forward.1} parent=1 // pred_fallthru
      _
    // Predicated region
    $region58: #{vae_gumbel_forward.1} parent=1 // pred_check
      _
    $region59: #{vae_gumbel_forward.1} parent=1 // pred_check_branch
      %2565 = sbr.rel (0) target = $region61
    $region60: #{vae_gumbel_forward.1} parent=1 // pred_region
      _
    $region61: #{vae_gumbel_forward.1} parent=1 // pred_fallthru
      _
    // Predicated region
    $region62: #{vae_gumbel_forward.1} parent=1 // pred_check
      _
    $region63: #{vae_gumbel_forward.1} parent=1 // pred_check_branch
      %2567 = sbr.rel (0) target = $region65
    $region64: #{vae_gumbel_forward.1} parent=1 // pred_region
      _
    $region65: #{vae_gumbel_forward.1} parent=1 // pred_fallthru
      _
    %2568 = vsyncpa [#allocation3], 1

</llo_original>
